<compile_context>
chip_gen: v7x
topology: tpu7x:2x2x1
jax: 0.10.0
libtpu: 0.0.40
codegen_flags: <defaults>
</compile_context>

<pallas_src>
import jax
import jax.numpy as jnp
from jax.experimental import pallas as pl
from jax.experimental.pallas import tpu as pltpu


# ----------------------------- Pallas kernel --------------------------------
def _downsample_conv_kernel(x_ref, xn_ref, w_ref, b_ref, o_ref):
    # x_ref : [tho, 2, 2, Wop, C]  phase-split padded rows of this tile
    #                              (dims: h_half, h_phase, w_phase, w_half, C)
    # xn_ref: [1,   2, 2, Wop, C]  the phase-split row right after the tile
    # w_ref : [9, C, Op]           conv weight, index = kh*3 + kw
    # b_ref : [1, Op]              bias (float32)
    # o_ref : [tho, Wo, Op]        output tile (NHWC, x.dtype)
    tho, _, _, Wop, C = x_ref.shape
    Wo = Wop - 1
    Op = o_ref.shape[-1]
    M = tho * Wo

    xv = x_ref[...]
    xnv = xn_ref[...]
    wv = w_ref[...]
    bv = b_ref[...].astype(jnp.float32)

    # Rows feeding each kh tap, all shaped [tho, 2(w_phase), Wop, C].
    x_kh0 = xv[:, 0]                                   # padded row 2*ho
    x_kh1 = xv[:, 1]                                   # padded row 2*ho + 1
    if tho > 1:                                        # padded row 2*ho + 2
        x_kh2 = jnp.concatenate([xv[1:, 0], xnv[:, 0]], axis=0)
    else:
        x_kh2 = xnv[:, 0]
    rows = (x_kh0, x_kh1, x_kh2)

    acc = jnp.zeros((M, Op), jnp.float32)
    for kh in range(3):
        xr = rows[kh]
        for kw in range(3):
            if kw == 0:
                tap = xr[:, 0, :Wo, :]                 # col 2*wo
            elif kw == 1:
                tap = xr[:, 1, :Wo, :]                 # col 2*wo + 1
            else:
                tap = xr[:, 0, 1:, :]                  # col 2*wo + 2
            acc = acc + jnp.dot(tap.reshape(M, C), wv[kh * 3 + kw],
                                preferred_element_type=jnp.float32)

    acc = acc + bv
    o_ref[...] = acc.reshape(tho, Wo, Op).astype(o_ref.dtype)


def _choose_h_tile(Ho, Wo, C, Op, itemsize,
                   target_rows=512, vmem_budget=24 * 1024 * 1024):
    """Largest divisor of Ho such that the M tile (tho*Wo rows) fits the budget."""
    Wop = Wo + 1
    best = 1
    for t in range(1, Ho + 1):
        if Ho % t:
            continue
        rows = t * Wo
        x_bytes = 2 * (t * 2 * 2 * Wop * C * itemsize)      # double-buffered
        n_bytes = 2 * (1 * 2 * 2 * Wop * C * itemsize)
        o_bytes = 2 * (rows * Op * itemsize)
        w_bytes = 9 * C * Op * itemsize + Op * 4
        a_bytes = rows * Op * 4                              # f32 accumulator
        if rows <= target_rows and (
                x_bytes + n_bytes + o_bytes + w_bytes + a_bytes) <= vmem_budget:
            best = t
    return best


# ------------------------------- DownSample ---------------------------------
def downsample_forward(x, temb, weight, bias, *, target_rows=512):
    """[B, C, H, W] -> [B, C, H//2, W//2]  (temb unused, as in the module)."""
    assert x.ndim == 4
    del temb
    B, C, H, W = x.shape
    O = weight.shape[0]
    Ho = (H + 2 - 3) // 2 + 1
    Wo = (W + 2 - 3) // 2 + 1
    Hh, Wop = Ho + 1, Wo + 1

    # Lane-pad out-channels only when O >= 128 and misaligned; for tiny O the
    # masked stores cost less than writing 128/O x the output bytes.
    Op = O if (O < 128 or O % 128 == 0) else pl.cdiv(O, 128) * 128

    # ---- glue: pad + one layout copy (1x input bytes, no im2col matrix) ----
    xp = jnp.pad(x, ((0, 0), (0, 0), (1, 2 * Ho + 1 - H), (1, 2 * Wo + 1 - W)))
    # xph[b, hh, hp, wp, wo, c] = xpad[b, c, 2*hh + hp, 2*wo + wp]
    xph = xp.reshape(B, C, Hh, 2, Wop, 2).transpose(0, 2, 3, 5, 4, 1)

    # weight [O, C, 3, 3] -> [9, C, Op]; bias -> [1, Op] (kept f32)
    w9 = jnp.transpose(weight, (2, 3, 1, 0)).reshape(9, C, O)
    b2 = bias.astype(jnp.float32).reshape(1, O)
    if Op != O:
        w9 = jnp.pad(w9, ((0, 0), (0, 0), (0, Op - O)))
        b2 = jnp.pad(b2, ((0, 0), (0, Op - O)))
    w9 = w9.astype(x.dtype)   # bf16 inputs -> bf16 MXU (f32 accumulate)

    tho = _choose_h_tile(Ho, Wo, C, Op, x.dtype.itemsize, target_rows=target_rows)
    grid = (B, Ho // tho)

    flops = 2 * B * Ho * Wo * 9 * C * Op
    bytes_accessed = (xph.size * xph.dtype.itemsize
                      + w9.size * w9.dtype.itemsize
                      + b2.size * 4
                      + B * Ho * Wo * Op * x.dtype.itemsize)

    out = pl.pallas_call(
        _downsample_conv_kernel,
        out_shape=jax.ShapeDtypeStruct((B, Ho, Wo, Op), x.dtype),
        grid_spec=pltpu.PrefetchScalarGridSpec(
            num_scalar_prefetch=0,
            grid=grid,
            in_specs=[
                # main tile rows [i*tho, (i+1)*tho)
                pl.BlockSpec((None, tho, 2, 2, Wop, C),
                             lambda b, i: (b, i, 0, 0, 0, 0)),
                # single boundary row (i+1)*tho (exists: Hh = Ho + 1)
                pl.BlockSpec((None, 1, 2, 2, Wop, C),
                             lambda b, i: (b, (i + 1) * tho, 0, 0, 0, 0)),
                pl.BlockSpec((9, C, Op), lambda b, i: (0, 0, 0)),
                pl.BlockSpec((1, Op), lambda b, i: (0, 0)),
            ],
            out_specs=pl.BlockSpec((None, tho, Wo, Op),
                                   lambda b, i: (b, i, 0, 0)),
        ),
        compiler_params=pltpu.CompilerParams(
            dimension_semantics=("parallel", "parallel"),
            vmem_limit_bytes=48 * 1024 * 1024,   # above 16/32 MiB scoped defaults
        ),
        cost_estimate=pl.CostEstimate(flops=flops, transcendentals=0,
                                      bytes_accessed=bytes_accessed),
    )(xph, xph, w9, b2)

    if Op != O:
        out = out[..., :O]
    return out.transpose(0, 3, 1, 2)   # NHWC -> NCHW (x.dtype already)


def init_downsample_params(key, in_ch):
    """Matches nn.Conv2d(in_ch, in_ch, 3) + xavier_uniform_ weight, zero bias."""
    fan_in = in_ch * 3 * 3
    fan_out = in_ch * 3 * 3
    bound = (6.0 / (fan_in + fan_out)) ** 0.5
    weight = jax.random.uniform(
        key, (in_ch, in_ch, 3, 3), jnp.float32, minval=-bound, maxval=bound
    )
    bias = jnp.zeros((in_ch,), jnp.float32)
    return weight, bias


# --------------------------------- main --------------------------------------
if __name__ == "__main__":
    key = jax.random.PRNGKey(0)
    k_w, k_x, k_t = jax.random.split(key, 3)

    B, C, H, W = 2, 4, 16, 16
    weight, bias = init_downsample_params(k_w, C)
    x = jax.random.normal(k_x, (B, C, H, W), jnp.float32)
    temb = jax.random.normal(k_t, (B, 32), jnp.float32)  # unused by forward

    out = jax.jit(downsample_forward)(x, temb, weight, bias)
    out = jax.block_until_ready(out)
    assert out.shape == (B, C, H // 2, W // 2), out.shape

    # reference check (plain XLA conv, NCHW, stride=2, pad=1)
    ref = jax.lax.conv_general_dilated(
        x, weight, window_strides=(2, 2), padding=((1, 1), (1, 1)),
        dimension_numbers=("NCHW", "OIHW", "NCHW"),
    ) + bias.reshape(1, C, 1, 1)
    assert jnp.allclose(out, ref, atol=1e-4, rtol=1e-4)

    print("KERNEL_OK")
</pallas_src>

<mosaic_0001>
module attributes {stable_mosaic.version = 11 : i64} {
  func.func @_downsample_conv_kernel(%arg0: i32, %arg1: i32, %arg2: memref<1x8x2x2x9x4xf32, #tpu.memory_space<vmem>>, %arg3: memref<1x1x2x2x9x4xf32, #tpu.memory_space<vmem>>, %arg4: memref<9x4x4xf32, #tpu.memory_space<vmem>>, %arg5: memref<1x4xf32, #tpu.memory_space<vmem>>, %arg6: memref<1x8x8x4xf32, #tpu.memory_space<vmem>>) attributes {dimension_semantics = [#tpu.dimension_semantics<parallel>, #tpu.dimension_semantics<parallel>], iteration_bounds = array<i64: 2, 1>, scalar_prefetch = 0 : i64, scratch_operands = 0 : i64, tpu.core_type = #tpu.core_type<tc>, window_params = [{transform_indices = @transform_0, window_bounds = array<i64: 1, 8, 2, 2, 9, 4>}, {transform_indices = @transform_1, window_bounds = array<i64: 1, 1, 2, 2, 9, 4>}, {pipeline_mode = #tpu.pipeline_mode<synchronous>, transform_indices = @transform_2, window_bounds = array<i64: 9, 4, 4>}, {pipeline_mode = #tpu.pipeline_mode<synchronous>, transform_indices = @transform_3, window_bounds = array<i64: 1, 4>}, {transform_indices = @transform_4, window_bounds = array<i64: 1, 8, 8, 4>}]} {
    %c0 = arith.constant 0 : index
    %c0_0 = arith.constant 0 : index
    %c0_1 = arith.constant 0 : index
    %c0_2 = arith.constant 0 : index
    %c0_3 = arith.constant 0 : index
    %c0_4 = arith.constant 0 : index
    %0 = vector.load %arg2[%c0, %c0_0, %c0_1, %c0_2, %c0_3, %c0_4] : memref<1x8x2x2x9x4xf32, #tpu.memory_space<vmem>>, vector<1x8x2x2x9x4xf32>
    %1 = vector.shape_cast %0 : vector<1x8x2x2x9x4xf32> to vector<8x2x2x9x4xf32>
    %c0_5 = arith.constant 0 : index
    %c0_6 = arith.constant 0 : index
    %c0_7 = arith.constant 0 : index
    %c0_8 = arith.constant 0 : index
    %c0_9 = arith.constant 0 : index
    %c0_10 = arith.constant 0 : index
    %2 = vector.load %arg3[%c0_5, %c0_6, %c0_7, %c0_8, %c0_9, %c0_10] : memref<1x1x2x2x9x4xf32, #tpu.memory_space<vmem>>, vector<1x1x2x2x9x4xf32>
    %3 = vector.shape_cast %2 : vector<1x1x2x2x9x4xf32> to vector<1x2x2x9x4xf32>
    %c0_11 = arith.constant 0 : index
    %c0_12 = arith.constant 0 : index
    %c0_13 = arith.constant 0 : index
    %4 = vector.load %arg4[%c0_11, %c0_12, %c0_13] : memref<9x4x4xf32, #tpu.memory_space<vmem>>, vector<9x4x4xf32>
    %c0_14 = arith.constant 0 : index
    %c0_15 = arith.constant 0 : index
    %5 = vector.load %arg5[%c0_14, %c0_15] : memref<1x4xf32, #tpu.memory_space<vmem>>, vector<1x4xf32>
    %6 = vector.extract_strided_slice %1 {offsets = [0, 0, 0, 0, 0], sizes = [8, 1, 2, 9, 4], strides = [1, 1, 1, 1, 1]} : vector<8x2x2x9x4xf32> to vector<8x1x2x9x4xf32>
    %7 = vector.shape_cast %6 : vector<8x1x2x9x4xf32> to vector<8x2x9x4xf32>
    %8 = vector.extract_strided_slice %1 {offsets = [0, 1, 0, 0, 0], sizes = [8, 1, 2, 9, 4], strides = [1, 1, 1, 1, 1]} : vector<8x2x2x9x4xf32> to vector<8x1x2x9x4xf32>
    %9 = vector.shape_cast %8 : vector<8x1x2x9x4xf32> to vector<8x2x9x4xf32>
    %10 = vector.extract_strided_slice %1 {offsets = [1, 0, 0, 0, 0], sizes = [7, 1, 2, 9, 4], strides = [1, 1, 1, 1, 1]} : vector<8x2x2x9x4xf32> to vector<7x1x2x9x4xf32>
    %11 = vector.shape_cast %10 : vector<7x1x2x9x4xf32> to vector<7x2x9x4xf32>
    %12 = vector.extract_strided_slice %3 {offsets = [0, 0, 0, 0, 0], sizes = [1, 1, 2, 9, 4], strides = [1, 1, 1, 1, 1]} : vector<1x2x2x9x4xf32> to vector<1x1x2x9x4xf32>
    %13 = vector.shape_cast %12 : vector<1x1x2x9x4xf32> to vector<1x2x9x4xf32>
    %14 = tpu.concatenate %11, %13 in 0 : vector<7x2x9x4xf32>, vector<1x2x9x4xf32> -> vector<8x2x9x4xf32>
    %cst = arith.constant 0.000000e+00 : f32
    %15 = vector.broadcast %cst : f32 to vector<64x4xf32>
    %16 = vector.extract_strided_slice %7 {offsets = [0, 0, 0, 0], sizes = [8, 1, 8, 4], strides = [1, 1, 1, 1]} : vector<8x2x9x4xf32> to vector<8x1x8x4xf32>
    %17 = vector.shape_cast %16 : vector<8x1x8x4xf32> to vector<8x8x4xf32>
    %18 = vector.shape_cast %17 : vector<8x8x4xf32> to vector<64x4xf32>
    %19 = vector.extract_strided_slice %4 {offsets = [0, 0, 0], sizes = [1, 4, 4], strides = [1, 1, 1]} : vector<9x4x4xf32> to vector<1x4x4xf32>
    %20 = vector.shape_cast %19 : vector<1x4x4xf32> to vector<4x4xf32>
    %cst_16 = arith.constant dense<0.000000e+00> : vector<64x4xf32>
    %21 = tpu.matmul %18, %20, %cst_16 {dimension_numbers = #tpu.dot_dimension_numbers<[1], [0], [0], [1], [0, 0, 1, 1], [], []>} : vector<64x4xf32>, vector<4x4xf32>, vector<64x4xf32> -> vector<64x4xf32>
    %22 = arith.addf %15, %21 : vector<64x4xf32>
    %23 = vector.extract_strided_slice %7 {offsets = [0, 1, 0, 0], sizes = [8, 1, 8, 4], strides = [1, 1, 1, 1]} : vector<8x2x9x4xf32> to vector<8x1x8x4xf32>
    %24 = vector.shape_cast %23 : vector<8x1x8x4xf32> to vector<8x8x4xf32>
    %25 = vector.shape_cast %24 : vector<8x8x4xf32> to vector<64x4xf32>
    %26 = vector.extract_strided_slice %4 {offsets = [1, 0, 0], sizes = [1, 4, 4], strides = [1, 1, 1]} : vector<9x4x4xf32> to vector<1x4x4xf32>
    %27 = vector.shape_cast %26 : vector<1x4x4xf32> to vector<4x4xf32>
    %cst_17 = arith.constant dense<0.000000e+00> : vector<64x4xf32>
    %28 = tpu.matmul %25, %27, %cst_17 {dimension_numbers = #tpu.dot_dimension_numbers<[1], [0], [0], [1], [0, 0, 1, 1], [], []>} : vector<64x4xf32>, vector<4x4xf32>, vector<64x4xf32> -> vector<64x4xf32>
    %29 = arith.addf %22, %28 : vector<64x4xf32>
    %30 = vector.extract_strided_slice %7 {offsets = [0, 0, 1, 0], sizes = [8, 1, 8, 4], strides = [1, 1, 1, 1]} : vector<8x2x9x4xf32> to vector<8x1x8x4xf32>
    %31 = vector.shape_cast %30 : vector<8x1x8x4xf32> to vector<8x8x4xf32>
    %32 = vector.shape_cast %31 : vector<8x8x4xf32> to vector<64x4xf32>
    %33 = vector.extract_strided_slice %4 {offsets = [2, 0, 0], sizes = [1, 4, 4], strides = [1, 1, 1]} : vector<9x4x4xf32> to vector<1x4x4xf32>
    %34 = vector.shape_cast %33 : vector<1x4x4xf32> to vector<4x4xf32>
    %cst_18 = arith.constant dense<0.000000e+00> : vector<64x4xf32>
    %35 = tpu.matmul %32, %34, %cst_18 {dimension_numbers = #tpu.dot_dimension_numbers<[1], [0], [0], [1], [0, 0, 1, 1], [], []>} : vector<64x4xf32>, vector<4x4xf32>, vector<64x4xf32> -> vector<64x4xf32>
    %36 = arith.addf %29, %35 : vector<64x4xf32>
    %37 = vector.extract_strided_slice %9 {offsets = [0, 0, 0, 0], sizes = [8, 1, 8, 4], strides = [1, 1, 1, 1]} : vector<8x2x9x4xf32> to vector<8x1x8x4xf32>
    %38 = vector.shape_cast %37 : vector<8x1x8x4xf32> to vector<8x8x4xf32>
    %39 = vector.shape_cast %38 : vector<8x8x4xf32> to vector<64x4xf32>
    %40 = vector.extract_strided_slice %4 {offsets = [3, 0, 0], sizes = [1, 4, 4], strides = [1, 1, 1]} : vector<9x4x4xf32> to vector<1x4x4xf32>
    %41 = vector.shape_cast %40 : vector<1x4x4xf32> to vector<4x4xf32>
    %cst_19 = arith.constant dense<0.000000e+00> : vector<64x4xf32>
    %42 = tpu.matmul %39, %41, %cst_19 {dimension_numbers = #tpu.dot_dimension_numbers<[1], [0], [0], [1], [0, 0, 1, 1], [], []>} : vector<64x4xf32>, vector<4x4xf32>, vector<64x4xf32> -> vector<64x4xf32>
    %43 = arith.addf %36, %42 : vector<64x4xf32>
    %44 = vector.extract_strided_slice %9 {offsets = [0, 1, 0, 0], sizes = [8, 1, 8, 4], strides = [1, 1, 1, 1]} : vector<8x2x9x4xf32> to vector<8x1x8x4xf32>
    %45 = vector.shape_cast %44 : vector<8x1x8x4xf32> to vector<8x8x4xf32>
    %46 = vector.shape_cast %45 : vector<8x8x4xf32> to vector<64x4xf32>
    %47 = vector.extract_strided_slice %4 {offsets = [4, 0, 0], sizes = [1, 4, 4], strides = [1, 1, 1]} : vector<9x4x4xf32> to vector<1x4x4xf32>
    %48 = vector.shape_cast %47 : vector<1x4x4xf32> to vector<4x4xf32>
    %cst_20 = arith.constant dense<0.000000e+00> : vector<64x4xf32>
    %49 = tpu.matmul %46, %48, %cst_20 {dimension_numbers = #tpu.dot_dimension_numbers<[1], [0], [0], [1], [0, 0, 1, 1], [], []>} : vector<64x4xf32>, vector<4x4xf32>, vector<64x4xf32> -> vector<64x4xf32>
    %50 = arith.addf %43, %49 : vector<64x4xf32>
    %51 = vector.extract_strided_slice %9 {offsets = [0, 0, 1, 0], sizes = [8, 1, 8, 4], strides = [1, 1, 1, 1]} : vector<8x2x9x4xf32> to vector<8x1x8x4xf32>
    %52 = vector.shape_cast %51 : vector<8x1x8x4xf32> to vector<8x8x4xf32>
    %53 = vector.shape_cast %52 : vector<8x8x4xf32> to vector<64x4xf32>
    %54 = vector.extract_strided_slice %4 {offsets = [5, 0, 0], sizes = [1, 4, 4], strides = [1, 1, 1]} : vector<9x4x4xf32> to vector<1x4x4xf32>
    %55 = vector.shape_cast %54 : vector<1x4x4xf32> to vector<4x4xf32>
    %cst_21 = arith.constant dense<0.000000e+00> : vector<64x4xf32>
    %56 = tpu.matmul %53, %55, %cst_21 {dimension_numbers = #tpu.dot_dimension_numbers<[1], [0], [0], [1], [0, 0, 1, 1], [], []>} : vector<64x4xf32>, vector<4x4xf32>, vector<64x4xf32> -> vector<64x4xf32>
    %57 = arith.addf %50, %56 : vector<64x4xf32>
    %58 = vector.extract_strided_slice %14 {offsets = [0, 0, 0, 0], sizes = [8, 1, 8, 4], strides = [1, 1, 1, 1]} : vector<8x2x9x4xf32> to vector<8x1x8x4xf32>
    %59 = vector.shape_cast %58 : vector<8x1x8x4xf32> to vector<8x8x4xf32>
    %60 = vector.shape_cast %59 : vector<8x8x4xf32> to vector<64x4xf32>
    %61 = vector.extract_strided_slice %4 {offsets = [6, 0, 0], sizes = [1, 4, 4], strides = [1, 1, 1]} : vector<9x4x4xf32> to vector<1x4x4xf32>
    %62 = vector.shape_cast %61 : vector<1x4x4xf32> to vector<4x4xf32>
    %cst_22 = arith.constant dense<0.000000e+00> : vector<64x4xf32>
    %63 = tpu.matmul %60, %62, %cst_22 {dimension_numbers = #tpu.dot_dimension_numbers<[1], [0], [0], [1], [0, 0, 1, 1], [], []>} : vector<64x4xf32>, vector<4x4xf32>, vector<64x4xf32> -> vector<64x4xf32>
    %64 = arith.addf %57, %63 : vector<64x4xf32>
    %65 = vector.extract_strided_slice %14 {offsets = [0, 1, 0, 0], sizes = [8, 1, 8, 4], strides = [1, 1, 1, 1]} : vector<8x2x9x4xf32> to vector<8x1x8x4xf32>
    %66 = vector.shape_cast %65 : vector<8x1x8x4xf32> to vector<8x8x4xf32>
    %67 = vector.shape_cast %66 : vector<8x8x4xf32> to vector<64x4xf32>
    %68 = vector.extract_strided_slice %4 {offsets = [7, 0, 0], sizes = [1, 4, 4], strides = [1, 1, 1]} : vector<9x4x4xf32> to vector<1x4x4xf32>
    %69 = vector.shape_cast %68 : vector<1x4x4xf32> to vector<4x4xf32>
    %cst_23 = arith.constant dense<0.000000e+00> : vector<64x4xf32>
    %70 = tpu.matmul %67, %69, %cst_23 {dimension_numbers = #tpu.dot_dimension_numbers<[1], [0], [0], [1], [0, 0, 1, 1], [], []>} : vector<64x4xf32>, vector<4x4xf32>, vector<64x4xf32> -> vector<64x4xf32>
    %71 = arith.addf %64, %70 : vector<64x4xf32>
    %72 = vector.extract_strided_slice %14 {offsets = [0, 0, 1, 0], sizes = [8, 1, 8, 4], strides = [1, 1, 1, 1]} : vector<8x2x9x4xf32> to vector<8x1x8x4xf32>
    %73 = vector.shape_cast %72 : vector<8x1x8x4xf32> to vector<8x8x4xf32>
    %74 = vector.shape_cast %73 : vector<8x8x4xf32> to vector<64x4xf32>
    %75 = vector.extract_strided_slice %4 {offsets = [8, 0, 0], sizes = [1, 4, 4], strides = [1, 1, 1]} : vector<9x4x4xf32> to vector<1x4x4xf32>
    %76 = vector.shape_cast %75 : vector<1x4x4xf32> to vector<4x4xf32>
    %cst_24 = arith.constant dense<0.000000e+00> : vector<64x4xf32>
    %77 = tpu.matmul %74, %76, %cst_24 {dimension_numbers = #tpu.dot_dimension_numbers<[1], [0], [0], [1], [0, 0, 1, 1], [], []>} : vector<64x4xf32>, vector<4x4xf32>, vector<64x4xf32> -> vector<64x4xf32>
    %78 = arith.addf %71, %77 : vector<64x4xf32>
    %79 = vector.broadcast %5 : vector<1x4xf32> to vector<64x4xf32>
    %80 = arith.addf %78, %79 : vector<64x4xf32>
    %81 = vector.shape_cast %80 : vector<64x4xf32> to vector<8x8x4xf32>
    %c0_25 = arith.constant 0 : index
    %c0_26 = arith.constant 0 : index
    %c0_27 = arith.constant 0 : index
    %c0_28 = arith.constant 0 : index
    %82 = vector.load %arg6[%c0_25, %c0_26, %c0_27, %c0_28] : memref<1x8x8x4xf32, #tpu.memory_space<vmem>>, vector<1x8x8x4xf32>
    %83 = vector.shape_cast %82 : vector<1x8x8x4xf32> to vector<8x8x4xf32>
    %84 = vector.shape_cast %81 : vector<8x8x4xf32> to vector<1x8x8x4xf32>
    tpu.vector_store %arg6[%c0_25, %c0_26, %c0_27, %c0_28], %84 {strides = array<i32>} : memref<1x8x8x4xf32, #tpu.memory_space<vmem>>, vector<1x8x8x4xf32>,
    return
  }
  func.func @transform_0(%arg0: i32, %arg1: i32) -> (i32, i32, i32, i32, i32, i32) {
    %c0_i32 = arith.constant 0 : i32
    %c0_i32_0 = arith.constant 0 : i32
    %c0_i32_1 = arith.constant 0 : i32
    %c0_i32_2 = arith.constant 0 : i32
    %c0_i32_3 = arith.constant 0 : i32
    return %arg0, %arg1, %c0_i32, %c0_i32_0, %c0_i32_1, %c0_i32_2 : i32, i32, i32, i32, i32, i32
  }
  func.func @transform_1(%arg0: i32, %arg1: i32) -> (i32, i32, i32, i32, i32, i32) {
    %c1_i32 = arith.constant 1 : i32
    %0 = arith.addi %arg1, %c1_i32 : i32
    %c8_i32 = arith.constant 8 : i32
    %1 = arith.muli %0, %c8_i32 : i32
    %c0_i32 = arith.constant 0 : i32
    %c0_i32_0 = arith.constant 0 : i32
    %c0_i32_1 = arith.constant 0 : i32
    %c0_i32_2 = arith.constant 0 : i32
    %c0_i32_3 = arith.constant 0 : i32
    return %arg0, %1, %c0_i32, %c0_i32_0, %c0_i32_1, %c0_i32_2 : i32, i32, i32, i32, i32, i32
  }
  func.func @transform_2(%arg0: i32, %arg1: i32) -> (i32, i32, i32) {
    %c0_i32 = arith.constant 0 : i32
    %c0_i32_0 = arith.constant 0 : i32
    %c0_i32_1 = arith.constant 0 : i32
    %c0_i32_2 = arith.constant 0 : i32
    return %c0_i32, %c0_i32_0, %c0_i32_1 : i32, i32, i32
  }
  func.func @transform_3(%arg0: i32, %arg1: i32) -> (i32, i32) {
    %c0_i32 = arith.constant 0 : i32
    %c0_i32_0 = arith.constant 0 : i32
    %c0_i32_1 = arith.constant 0 : i32
    return %c0_i32, %c0_i32_0 : i32, i32
  }
  func.func @transform_4(%arg0: i32, %arg1: i32) -> (i32, i32, i32, i32) {
    %c0_i32 = arith.constant 0 : i32
    %c0_i32_0 = arith.constant 0 : i32
    %c0_i32_1 = arith.constant 0 : i32
    return %arg0, %arg1, %c0_i32, %c0_i32_0 : i32, i32, i32, i32
  }
}

</mosaic_0001>

<llo_original>
// kernel: downsample_forward.1
$region0: #{downsample_forward.1}
  #allocation0 [shape = 'u32[]', space=smem, size = 0x4, offset = 0x4, fixed_abs, tag = 'smem constant byte address 0x4 - core index']
  #allocation1 [shape = 'u32[144,128]{1,0:T(1,128)}', space=vmem, size = 0x12000, scoped, tag = 'internal scratch']
  %s0 = inlined_call_operand.vmem [shape: f32[2,9,2,2,9,4], index: 0, kind: input, shape index: {}, may-alias: {0,1}]
  %s1 = inlined_call_operand.vmem [shape: f32[2,9,2,2,9,4], index: 1, kind: input, shape index: {}, may-alias: {0,1}]
  %s2 = inlined_call_operand.vmem [shape: f32[9,4,4], index: 2, kind: input, shape index: {}]
  %s3 = inlined_call_operand.vmem [shape: f32[1,4], index: 3, kind: input, shape index: {}]
  %s4 = inlined_call_operand.vmem [shape: f32[2,8,8,4], index: 4, kind: output, shape index: {}]
  %s5 = sld [smem:[#allocation0]]
  $region49: #{downsample_forward.1} parent=0
    _
  %s7 = ssub.s32 1, %s5
  %s8 = scalar_select 0, %s7, %s5
  loop: start=0, step=1, limit=4
  $region2: #{downsample_forward.1} parent=0 // loop_pre_header
    _
  $region3: #{downsample_forward.1} parent=0 // loop_header
    %s10 = sphi 0, %s14
    %p11 = scmp.ge.s32.totalorder %s10, 4
    %s17 = sphi 0, %s29
    %s18 = sphi 0, %s25
    %s19 = sphi 0, %s17
    %s20 = sphi 0, %s18
    %s21 = sphi 0, %s19
    %s22 = sphi 0, %s20
    %s34 = sphi 0, %s36
    %s37 = sphi 0, %s34
    %s38 = sphi 0, %s37
    %s54 = sphi 0, %s38
    %s66 = sphi 0, %s68
    %s69 = sphi 0, %s66
    %s70 = sphi 0, %s69
    %s86 = sphi 0, %s70
    %s90 = sphi 0, %s90
    %s92 = sphi 0, %s90
    %s93 = sphi 0, %s92
    %s107 = sphi 0, %s93
    %s111 = sphi 0, %s111
    %s113 = sphi 0, %s111
    %s114 = sphi 0, %s113
    %s128 = sphi 0, %s114
    %s136 = sphi 0, %s138
    %s139 = sphi 0, %s136
    %s140 = sphi 0, %s139
    %s156 = sphi 0, %s140
  $region4: #{downsample_forward.1} parent=0 // loop_header_branch
    %13 = sbr.rel (%p11) target = $region8
  $region5: #{downsample_forward.1} parent=0 // loop_body
    %s15 = ssub.s32 %s10, 1
    %s16 = ssub.s32 %s10, 2
    %s23 = sadd.s32 1, %s18
    %p24 = scmp.ge.s32.totalorder %s23, 1
    %s25 = scalar_select %p24, 0, %s23
    %s26 = sadd.s32 1, %s17
    %s27 = scalar_select %p24, %s26, %s17
    %p28 = scmp.ge.s32.totalorder %s27, 2
    %s29 = scalar_select %p28, 0, %s27
    %s30 = ssub.s32 %s17, %s29
    %s31 = ssub.s32 %s18, %s25
    %s32 = sor.u32 %s30, %s31
    %p33 = scmp.eq.s32.totalorder %s32, 0
    %s35 = sadd.s32 %s34, 1
    %s36 = scalar_select %p33, %s34, %s35
    %p39 = pneg %p33
    %p40 = scmp.eq.s32.totalorder %s10, 1
    %p41 = por %p39, %p40
    %p42 = scmp.ne.s32.totalorder %s34, %s37
    %p43 = scmp.eq.s32.totalorder %s10, 0
    %p44 = por %p42, %p43
    %p45 = scmp.ne.s32.totalorder %s34, %s37
    %p46 = scmp.eq.s32.totalorder %s15, 1
    %p47 = por %p45, %p46
    %p48 = scmp.ne.s32.totalorder %s37, %s38
    %p49 = scmp.eq.s32.totalorder %s15, 0
    %p50 = por %p48, %p49
    %p51 = scmp.ne.s32.totalorder %s37, %s38
    %p52 = scmp.eq.s32.totalorder %s16, 1
    %p53 = por %p51, %p52
    %p55 = scmp.ne.s32.totalorder %s38, %s54
    %p56 = scmp.eq.s32.totalorder %s16, 0
    %p57 = por %p55, %p56
    %s58 = sadd.s32 %s18, 1
    %s59 = smul.u32 %s58, 8
    %s60 = sadd.s32 %s25, 1
    %s61 = smul.u32 %s60, 8
    %s62 = ssub.s32 %s17, %s29
    %s63 = ssub.s32 %s59, %s61
    %s64 = sor.u32 %s62, %s63
    %p65 = scmp.eq.s32.totalorder %s64, 0
    %s67 = sadd.s32 %s66, 1
    %s68 = scalar_select %p65, %s66, %s67
    %p71 = pneg %p65
    %p72 = scmp.eq.s32.totalorder %s10, 1
    %p73 = por %p71, %p72
    %p74 = scmp.ne.s32.totalorder %s66, %s69
    %p75 = scmp.eq.s32.totalorder %s10, 0
    %p76 = por %p74, %p75
    %p77 = scmp.ne.s32.totalorder %s66, %s69
    %p78 = scmp.eq.s32.totalorder %s15, 1
    %p79 = por %p77, %p78
    %p80 = scmp.ne.s32.totalorder %s69, %s70
    %p81 = scmp.eq.s32.totalorder %s15, 0
    %p82 = por %p80, %p81
    %p83 = scmp.ne.s32.totalorder %s69, %s70
    %p84 = scmp.eq.s32.totalorder %s16, 1
    %p85 = por %p83, %p84
    %p87 = scmp.ne.s32.totalorder %s70, %s86
    %p88 = scmp.eq.s32.totalorder %s16, 0
    %p89 = por %p87, %p88
    %s91 = sadd.s32 %s90, 1
    %p94 = scmp.eq.s32.totalorder %s10, 1
    %p95 = scmp.ne.s32.totalorder %s90, %s92
    %p96 = scmp.eq.s32.totalorder %s10, 0
    %p97 = por %p95, %p96
    %p98 = scmp.ne.s32.totalorder %s90, %s92
    %p99 = scmp.eq.s32.totalorder %s15, 1
    %p100 = por %p98, %p99
    %p101 = scmp.ne.s32.totalorder %s92, %s93
    %p102 = scmp.eq.s32.totalorder %s15, 0
    %p103 = por %p101, %p102
    %p104 = scmp.ne.s32.totalorder %s92, %s93
    %p105 = scmp.eq.s32.totalorder %s16, 1
    %p106 = por %p104, %p105
    %p108 = scmp.ne.s32.totalorder %s93, %s107
    %p109 = scmp.eq.s32.totalorder %s16, 0
    %p110 = por %p108, %p109
    %s112 = sadd.s32 %s111, 1
    %p115 = scmp.eq.s32.totalorder %s10, 1
    %p116 = scmp.ne.s32.totalorder %s111, %s113
    %p117 = scmp.eq.s32.totalorder %s10, 0
    %p118 = por %p116, %p117
    %p119 = scmp.ne.s32.totalorder %s111, %s113
    %p120 = scmp.eq.s32.totalorder %s15, 1
    %p121 = por %p119, %p120
    %p122 = scmp.ne.s32.totalorder %s113, %s114
    %p123 = scmp.eq.s32.totalorder %s15, 0
    %p124 = por %p122, %p123
    %p125 = scmp.ne.s32.totalorder %s113, %s114
    %p126 = scmp.eq.s32.totalorder %s16, 1
    %p127 = por %p125, %p126
    %p129 = scmp.ne.s32.totalorder %s114, %s128
    %p130 = scmp.eq.s32.totalorder %s16, 0
    %p131 = por %p129, %p130
    %s132 = ssub.s32 %s17, %s29
    %s133 = ssub.s32 %s18, %s25
    %s134 = sor.u32 %s132, %s133
    %p135 = scmp.eq.s32.totalorder %s134, 0
    %s137 = sadd.s32 %s136, 1
    %s138 = scalar_select %p135, %s136, %s137
    %p141 = pneg %p135
    %p142 = scmp.eq.s32.totalorder %s10, 1
    %p143 = por %p141, %p142
    %p144 = scmp.ne.s32.totalorder %s136, %s139
    %p145 = scmp.eq.s32.totalorder %s10, 0
    %p146 = por %p144, %p145
    %p147 = scmp.ne.s32.totalorder %s136, %s139
    %p148 = scmp.eq.s32.totalorder %s15, 1
    %p149 = por %p147, %p148
    %p150 = scmp.ne.s32.totalorder %s139, %s140
    %p151 = scmp.eq.s32.totalorder %s15, 0
    %p152 = por %p150, %p151
    %p153 = scmp.ne.s32.totalorder %s139, %s140
    %p154 = scmp.eq.s32.totalorder %s16, 1
    %p155 = por %p153, %p154
    %p157 = scmp.ne.s32.totalorder %s140, %s156
    %p158 = scmp.eq.s32.totalorder %s16, 0
    %p159 = por %p157, %p158
    %p160 = scmp.le.s32.totalorder 1, %s10
    %p161 = scmp.lt.s32.totalorder %s10, 3
    %p162 = pnand %p160, %p161
    %p163 = pneg %p162
    // Predicated region
    $region9: #{downsample_forward.1} parent=5 // pred_check
      _
    $region10: #{downsample_forward.1} parent=5 // pred_check_branch
      %165 = sbr.rel (%p162) target = $region12
    $region11: #{downsample_forward.1} parent=5 // pred_region
      %s166 = ssub.s32 %s10, 1
      // Predicated region
      $region13: #{downsample_forward.1} parent=11 // pred_check
        %p167 = pneg %p103
      $region14: #{downsample_forward.1} parent=11 // pred_check_branch
        %169 = sbr.rel (%p167) target = $region16
      $region15: #{downsample_forward.1} parent=11 // pred_region
        _
      $region16: #{downsample_forward.1} parent=11 // pred_fallthru
        _
      // Predicated region
      $region17: #{downsample_forward.1} parent=11 // pred_check
        %p170 = pneg %p124
      $region18: #{downsample_forward.1} parent=11 // pred_check_branch
        %172 = sbr.rel (%p170) target = $region20
      $region19: #{downsample_forward.1} parent=11 // pred_region
        _
      $region20: #{downsample_forward.1} parent=11 // pred_fallthru
        _
    $region12: #{downsample_forward.1} parent=5 // pred_fallthru
      _
    %p173 = scmp.lt.s32.totalorder %s10, 2
    // Predicated region
    $region21: #{downsample_forward.1} parent=5 // pred_check
      %p174 = pneg %p173
    $region22: #{downsample_forward.1} parent=5 // pred_check_branch
      %176 = sbr.rel (%p174) target = $region24
    $region23: #{downsample_forward.1} parent=5 // pred_region
      // Predicated region
      $region25: #{downsample_forward.1} parent=23 // pred_check
        %p177 = pneg %p44
      $region26: #{downsample_forward.1} parent=23 // pred_check_branch
        %179 = sbr.rel (%p177) target = $region28
      $region27: #{downsample_forward.1} parent=23 // pred_region
        %s180 = smul.u32 8, %s18
        %s181 = ssub.s32 9, %s180
        %p182 = scmp.lt.s32.totalorder %s181, 8
        %s183 = scalar_select %p182, %s181, 8
        %s184 = smul.u32 128, %s183
        %s185 = smul.u32 %s184, 2
        %s186 = smul.u32 %s185, 2
        %s187 = smul.u32 %s186, 2
        %p188 = scmp.lt.s32.totalorder %s17, 1
        %s189 = scalar_select %p188, %s17, 1
        %p190 = scmp.lt.s32.totalorder %s180, 8
        %s191 = scalar_select %p190, %s180, 8
        %s192 = smul.addr %s191, 8
        %s193 = smul.addr %s189, 72
        %s194 = sadd.s32 %s192, %s193
        %s195 = smul.addr %s194, 8
        %s196 = scalar_lea.vmem %s0, %s195
        %s197 = smul.u32 8, %s18
        %s198 = ssub.s32 9, %s197
        %p199 = scmp.lt.s32.totalorder %s198, 8
        %s200 = scalar_select %p199, %s198, 8
        %s201 = smul.u32 128, %s200
        %s202 = smul.u32 %s201, 2
        %s203 = smul.u32 %s202, 2
        %s204 = smul.u32 %s203, 2
      $region28: #{downsample_forward.1} parent=23 // pred_fallthru
        _
      // Predicated region
      $region29: #{downsample_forward.1} parent=23 // pred_check
        %p205 = pneg %p76
      $region30: #{downsample_forward.1} parent=23 // pred_check_branch
        %207 = sbr.rel (%p205) target = $region32
      $region31: #{downsample_forward.1} parent=23 // pred_region
        %s208 = sadd.s32 %s18, 1
        %s209 = smul.u32 %s208, 8
        %p210 = scmp.lt.s32.totalorder %s17, 1
        %s211 = scalar_select %p210, %s17, 1
        %p212 = scmp.lt.s32.totalorder %s209, 8
        %s213 = scalar_select %p212, %s209, 8
        %s214 = smul.addr %s213, 8
        %s215 = smul.addr %s211, 72
        %s216 = sadd.s32 %s214, %s215
        %s217 = smul.addr %s216, 8
        %s218 = scalar_lea.vmem %s1, %s217
        %s219 = sadd.s32 %s18, 1
        %s220 = smul.u32 %s219, 8
      $region32: #{downsample_forward.1} parent=23 // pred_fallthru
        _
    $region24: #{downsample_forward.1} parent=5 // pred_fallthru
      _
    %p221 = scmp.le.s32.totalorder 1, %s10
    %p222 = scmp.lt.s32.totalorder %s10, 3
    %p223 = pnand %p221, %p222
    %p224 = pneg %p223
    // Predicated region
    $region33: #{downsample_forward.1} parent=5 // pred_check
      _
    $region34: #{downsample_forward.1} parent=5 // pred_check_branch
      %226 = sbr.rel (%p223) target = $region36
    $region35: #{downsample_forward.1} parent=5 // pred_region
      %s227 = ssub.s32 %s10, 1
      %s228 = smul.u32 8, %s20
      %s229 = ssub.s32 9, %s228
      %p230 = scmp.lt.s32.totalorder %s229, 8
      %s231 = scalar_select %p230, %s229, 8
      %s232 = smul.u32 128, %s231
      %s233 = smul.u32 %s232, 2
      %s234 = smul.u32 %s233, 2
      %s235 = smul.u32 %s234, 2
      %p236 = scmp.lt.s32.totalorder %s19, 1
      %s237 = scalar_select %p236, %s19, 1
      %p238 = scmp.lt.s32.totalorder %s228, 8
      %s239 = scalar_select %p238, %s228, 8
      %s240 = smul.addr %s239, 8
      %s241 = smul.addr %s237, 72
      %s242 = sadd.s32 %s240, %s241
      %s243 = smul.addr %s242, 8
      %s244 = scalar_lea.vmem %s0, %s243
      %p245 = pneg %p50
      %p246 = pneg %p47
      %s247 = sadd.s32 %s20, 1
      %s248 = smul.u32 %s247, 8
      %p249 = scmp.lt.s32.totalorder %s19, 1
      %s250 = scalar_select %p249, %s19, 1
      %p251 = scmp.lt.s32.totalorder %s248, 8
      %s252 = scalar_select %p251, %s248, 8
      %s253 = smul.addr %s252, 8
      %s254 = smul.addr %s250, 72
      %s255 = sadd.s32 %s253, %s254
      %s256 = smul.addr %s255, 8
      %s257 = scalar_lea.vmem %s1, %s256
      %p258 = pneg %p82
      %p259 = pneg %p79
      %p260 = pneg %p103
      %p261 = pneg %p100
      %p262 = pneg %p124
      %p263 = pneg %p121
      %p264 = pneg %p152
      %p265 = pneg %p149
      %s266 = smul.u32 8, %s20
      %p267 = scmp.lt.s32.totalorder %s19, 1
      %s268 = scalar_select %p267, %s19, 1
      %p269 = scmp.lt.s32.totalorder %s266, 7
      %s270 = scalar_select %p269, %s266, 7
      %s271 = smul.addr %s268, 8
      %s272 = sadd.s32 %s270, %s271
      %s273 = smul.addr %s272, 8
      %s274 = scalar_lea.vmem %s4, %s273
      %s275 = smul.u32 8, %s20
      %s276 = ssub.s32 9, %s275
      %p277 = scmp.lt.s32.totalorder %s276, 8
      %s278 = scalar_select %p277, %s276, 8
      %s279 = smul.u32 128, %s278
      %s280 = smul.u32 %s279, 2
      %s281 = smul.u32 %s280, 2
      %s282 = smul.u32 %s281, 2
      %p283 = scmp.lt.s32.totalorder %s19, 1
      %s284 = scalar_select %p283, %s19, 1
      %p285 = scmp.lt.s32.totalorder %s275, 8
      %s286 = scalar_select %p285, %s275, 8
      %s287 = smul.addr %s286, 8
      %s288 = smul.addr %s284, 72
      %s289 = sadd.s32 %s287, %s288
      %s290 = smul.addr %s289, 8
      %s291 = scalar_lea.vmem %s0, %s290
      %s292 = smul.u32 8, %s20
      %s293 = ssub.s32 9, %s292
      %p294 = scmp.lt.s32.totalorder %s293, 8
      %s295 = scalar_select %p294, %s293, 8
      %s296 = smul.u32 128, %s295
      %s297 = smul.u32 %s296, 2
      %s298 = smul.u32 %s297, 2
      %s299 = smul.u32 %s298, 2
      %s300 = sadd.s32 %s20, 1
      %s301 = smul.u32 %s300, 8
      %p302 = scmp.lt.s32.totalorder %s19, 1
      %s303 = scalar_select %p302, %s19, 1
      %p304 = scmp.lt.s32.totalorder %s301, 8
      %s305 = scalar_select %p304, %s301, 8
      %s306 = smul.addr %s305, 8
      %s307 = smul.addr %s303, 72
      %s308 = sadd.s32 %s306, %s307
      %s309 = smul.addr %s308, 8
      %s310 = scalar_lea.vmem %s1, %s309
      %s311 = sadd.s32 %s20, 1
      %s312 = smul.u32 %s311, 8
      %s313 = smul.u32 8, %s20
      %p314 = scmp.lt.s32.totalorder %s19, 1
      %s315 = scalar_select %p314, %s19, 1
      %p316 = scmp.lt.s32.totalorder %s313, 7
      %s317 = scalar_select %p316, %s313, 7
      %s318 = smul.addr %s315, 8
      %s319 = sadd.s32 %s317, %s318
      %s320 = smul.addr %s319, 8
      %s321 = scalar_lea.vmem %s4, %s320
      %s322 = smul.u32 8, %s20
      %v323 = vld [vmem:[%s291] sm:$0xff]
      %v324 = vld [vmem:[%s291 + $0x8] sm:$0x1]
      %v325 = vld [vmem:[%s291 + $0x10] sm:$0xff]
      %v326 = vld [vmem:[%s291 + $0x20] sm:$0xff]
      %v327 = vld [vmem:[%s291 + $0x28] sm:$0x1]
      %v328 = vld [vmem:[%s291 + $0x30] sm:$0xff]
      %v329 = vld [vmem:[%s291 + $0x40] sm:$0xff]
      %v330 = vld [vmem:[%s291 + $0x48] sm:$0x1]
      %v331 = vld [vmem:[%s291 + $0x50] sm:$0xff]
      %v332 = vld [vmem:[%s291 + $0x60] sm:$0xff]
      %v333 = vld [vmem:[%s291 + $0x68] sm:$0x1]
      %v334 = vld [vmem:[%s291 + $0x70] sm:$0xff]
      %v335 = vld [vmem:[%s291 + $0x80] sm:$0xff]
      %v336 = vld [vmem:[%s291 + $0x88] sm:$0x1]
      %v337 = vld [vmem:[%s291 + $0x90] sm:$0xff]
      %v338 = vld [vmem:[%s291 + $0xa0] sm:$0xff]
      %v339 = vld [vmem:[%s291 + $0xa8] sm:$0x1]
      %v340 = vld [vmem:[%s291 + $0xb0] sm:$0xff]
      %v341 = vld [vmem:[%s291 + $0xc0] sm:$0xff]
      %v342 = vld [vmem:[%s291 + $0xc8] sm:$0x1]
      %v343 = vld [vmem:[%s291 + $0xd0] sm:$0xff]
      %v344 = vld [vmem:[%s291 + $0xe0] sm:$0xff]
      %v345 = vld [vmem:[%s291 + $0xe8] sm:$0x1]
      %v346 = vld [vmem:[%s291 + $0xf0] sm:$0xff]
      %v347 = vld [vmem:[%s291 + $0x100] sm:$0xff]
      %v348 = vld [vmem:[%s291 + $0x108] sm:$0x1]
      %v349 = vld [vmem:[%s291 + $0x110] sm:$0xff]
      %v350 = vld [vmem:[%s291 + $0x120] sm:$0xff]
      %v351 = vld [vmem:[%s291 + $0x128] sm:$0x1]
      %v352 = vld [vmem:[%s291 + $0x130] sm:$0xff]
      %v353 = vld [vmem:[%s291 + $0x140] sm:$0xff]
      %v354 = vld [vmem:[%s291 + $0x148] sm:$0x1]
      %v355 = vld [vmem:[%s291 + $0x150] sm:$0xff]
      %v356 = vld [vmem:[%s291 + $0x160] sm:$0xff]
      %v357 = vld [vmem:[%s291 + $0x168] sm:$0x1]
      %v358 = vld [vmem:[%s291 + $0x170] sm:$0xff]
      %v359 = vld [vmem:[%s291 + $0x180] sm:$0xff]
      %v360 = vld [vmem:[%s291 + $0x188] sm:$0x1]
      %v361 = vld [vmem:[%s291 + $0x190] sm:$0xff]
      %v362 = vld [vmem:[%s291 + $0x1a0] sm:$0xff]
      %v363 = vld [vmem:[%s291 + $0x1a8] sm:$0x1]
      %v364 = vld [vmem:[%s291 + $0x1b0] sm:$0xff]
      %v365 = vld [vmem:[%s291 + $0x1c0] sm:$0xff]
      %v366 = vld [vmem:[%s291 + $0x1c8] sm:$0x1]
      %v367 = vld [vmem:[%s291 + $0x1d0] sm:$0xff]
      %v368 = vld [vmem:[%s291 + $0x1e0] sm:$0xff]
      %v369 = vld [vmem:[%s291 + $0x1e8] sm:$0x1]
      %v370 = vld [vmem:[%s291 + $0x1f0] sm:$0xff]
      %v371 = vld [vmem:[%s310] sm:$0xff]
      %v372 = vld [vmem:[%s310 + $0x8] sm:$0x1]
      %v373 = vld [vmem:[%s310 + $0x10] sm:$0xff]
      %v374 = vld [vmem:[%s2] sm:$0xf]
      %v375 = vld [vmem:[%s2 + $0x4] sm:$0xf]
      %v376 = vld [vmem:[%s2 + $0x8] sm:$0xf]
      %v377 = vld [vmem:[%s2 + $0xc] sm:$0xf]
      %v378 = vld [vmem:[%s2 + $0x10] sm:$0xf]
      %v379 = vld [vmem:[%s2 + $0x14] sm:$0xf]
      %v380 = vld [vmem:[%s2 + $0x18] sm:$0xf]
      %v381 = vld [vmem:[%s2 + $0x1c] sm:$0xf]
      %v382 = vld [vmem:[%s2 + $0x20] sm:$0xf]
      %v383 = vld [vmem:[%s3] sm:$0x1]
      %vm384 = vcmask 31744
      %v386 = vsel %vm384, %v325, 0
      %v389 = vsel %vm384, %v331, 0
      %v392 = vsel %vm384, %v337, 0
      %v395 = vsel %vm384, %v343, 0
      %v398 = vsel %vm384, %v349, 0
      %v401 = vsel %vm384, %v355, 0
      %v404 = vsel %vm384, %v361, 0
      %v407 = vsel %vm384, %v367, 0
      %vm409 = vcmask 1043456
      %v411 = vsel %vm409, %v375, 0
      %413 = vmatprep.subr.mxu0 0.0
      %414 = vmatpush1.msra.mxu0 %v411
      %415 = vmatprep.subr.mxu0 0.0
      %416 = vmatpush1.msra.mxu0 0.0
      %417 = vmatprep.subr.mxu0 0.0
      %418 = vmatpush1.msra.mxu0 0.0
      %419 = vmatprep.subr.mxu0 0.0
      %420 = vmatpush1.msra.mxu0 0.0
      %421 = vmatprep.subr.mxu0 0.0
      %422 = vmatpush1.msra.mxu0 0.0
      %423 = vmatprep.subr.mxu0 0.0
      %424 = vmatpush1.msra.mxu0 0.0
      %425 = vmatprep.subr.mxu0 0.0
      %426 = vmatpush1.msra.mxu0 0.0
      %427 = vmatprep.subr.mxu0 0.0
      %428 = vmatpush1.msra.mxu0 0.0
      %429 = vmatprep.subr.mxu0 0.0
      %430 = vmatpush1.msra.mxu0 0.0
      %431 = vmatprep.subr.mxu0 0.0
      %432 = vmatpush1.msra.mxu0 0.0
      %433 = vmatprep.subr.mxu0 0.0
      %434 = vmatpush1.msra.mxu0 0.0
      %435 = vmatprep.subr.mxu0 0.0
      %436 = vmatpush1.msra.mxu0 0.0
      %437 = vmatprep.subr.mxu0 0.0
      %438 = vmatpush1.msra.mxu0 0.0
      %439 = vmatprep.subr.mxu0 0.0
      %440 = vmatpush1.msra.mxu0 0.0
      %441 = vmatprep.subr.mxu0 0.0
      %442 = vmatpush1.msra.mxu0 0.0
      %443 = vmatprep.subr.mxu0 0.0
      %444 = vmatpush1.msra.mxu0 0.0
      %445 = vmatprep.subr.mxu0 0.0
      %446 = vmatpush1.msra.mxu0 0.0
      %447 = vmatprep.subr.mxu0 0.0
      %448 = vmatpush1.msra.mxu0 0.0
      %449 = vmatprep.subr.mxu0 0.0
      %450 = vmatpush1.msra.mxu0 0.0
      %451 = vmatprep.subr.mxu0 0.0
      %452 = vmatpush1.msra.mxu0 0.0
      %453 = vmatprep.subr.mxu0 0.0
      %454 = vmatpush1.msra.mxu0 0.0
      %455 = vmatprep.subr.mxu0 0.0
      %456 = vmatpush1.msra.mxu0 0.0
      %457 = vmatprep.subr.mxu0 0.0
      %458 = vmatpush1.msra.mxu0 0.0
      %459 = vmatprep.subr.mxu0 0.0
      %460 = vmatpush1.msra.mxu0 0.0
      %461 = vmatprep.subr.mxu0 0.0
      %462 = vmatpush1.msra.mxu0 0.0
      %463 = vmatprep.subr.mxu0 0.0
      %464 = vmatpush1.msra.mxu0 0.0
      %465 = vmatprep.subr.mxu0 0.0
      %466 = vmatpush1.msra.mxu0 0.0
      %467 = vmatprep.subr.mxu0 0.0
      %468 = vmatpush1.msra.mxu0 0.0
      %469 = vmatprep.subr.mxu0 0.0
      %470 = vmatpush1.msra.mxu0 0.0
      %471 = vmatprep.subr.mxu0 0.0
      %472 = vmatpush1.msra.mxu0 0.0
      %473 = vmatprep.subr.mxu0 0.0
      %474 = vmatpush1.msra.mxu0 0.0
      %475 = vmatprep.subr.mxu0 0.0
      %476 = vmatpush1.msra.mxu0 0.0
      %477 = vmatprep.mubr.f32.mxu0 0.0
      %478 = vmatmul.mubr.f32.gmra.mrb[0].mxu0 %v386
      %v479 = vpop.f32.mrb[0].mxu0
      %v480 = vadd.f32 0.0, %v479
      %v481 = vpop.f32.mrb[0].mxu0
      %482 = vmatprep.mubr.f32.mxu0 0.0
      %483 = vmatmul.mubr.f32.gmra.mrb[0].mxu0 %v389
      %v484 = vpop.f32.mrb[0].mxu0
      %v485 = vadd.f32 0.0, %v484
      %v486 = vpop.f32.mrb[0].mxu0
      %487 = vmatprep.mubr.f32.mxu0 0.0
      %488 = vmatmul.mubr.f32.gmra.mrb[0].mxu0 %v392
      %v489 = vpop.f32.mrb[0].mxu0
      %v490 = vadd.f32 0.0, %v489
      %v491 = vpop.f32.mrb[0].mxu0
      %492 = vmatprep.mubr.f32.mxu0 0.0
      %493 = vmatmul.mubr.f32.gmra.mrb[0].mxu0 %v395
      %v494 = vpop.f32.mrb[0].mxu0
      %v495 = vadd.f32 0.0, %v494
      %v496 = vpop.f32.mrb[0].mxu0
      %497 = vmatprep.mubr.f32.mxu0 0.0
      %498 = vmatmul.mubr.f32.gmra.mrb[0].mxu0 %v398
      %v499 = vpop.f32.mrb[0].mxu0
      %v500 = vadd.f32 0.0, %v499
      %v501 = vpop.f32.mrb[0].mxu0
      %502 = vmatprep.mubr.f32.mxu0 0.0
      %503 = vmatmul.mubr.f32.gmra.mrb[0].mxu0 %v401
      %v504 = vpop.f32.mrb[0].mxu0
      %v505 = vadd.f32 0.0, %v504
      %v506 = vpop.f32.mrb[0].mxu0
      %507 = vmatprep.mubr.f32.mxu0 0.0
      %508 = vmatmul.mubr.f32.gmra.mrb[0].mxu0 %v404
      %v509 = vpop.f32.mrb[0].mxu0
      %v510 = vadd.f32 0.0, %v509
      %v511 = vpop.f32.mrb[0].mxu0
      %512 = vmatprep.mubr.f32.mxu0 0.0
      %513 = vmatmul.mubr.f32.gmra.mrb[0].mxu0 %v407
      %v514 = vpop.f32.mrb[0].mxu0
      %v515 = vadd.f32 0.0, %v514
      %v516 = vpop.f32.mrb[0].mxu0
      %517 = vdwg.mxu0
      %v519 = vsel %vm384, %v323, 0
      %v522 = vsel %vm384, %v329, 0
      %v525 = vsel %vm384, %v335, 0
      %v528 = vsel %vm384, %v341, 0
      %v531 = vsel %vm384, %v347, 0
      %v534 = vsel %vm384, %v353, 0
      %v537 = vsel %vm384, %v359, 0
      %v540 = vsel %vm384, %v365, 0
      %v543 = vsel %vm409, %v374, 0
      %545 = vmatprep.subr.mxu0 0.0
      %546 = vmatpush1.msra.mxu0 %v543
      %547 = vmatprep.subr.mxu0 0.0
      %548 = vmatpush1.msra.mxu0 0.0
      %549 = vmatprep.subr.mxu0 0.0
      %550 = vmatpush1.msra.mxu0 0.0
      %551 = vmatprep.subr.mxu0 0.0
      %552 = vmatpush1.msra.mxu0 0.0
      %553 = vmatprep.subr.mxu0 0.0
      %554 = vmatpush1.msra.mxu0 0.0
      %555 = vmatprep.subr.mxu0 0.0
      %556 = vmatpush1.msra.mxu0 0.0
      %557 = vmatprep.subr.mxu0 0.0
      %558 = vmatpush1.msra.mxu0 0.0
      %559 = vmatprep.subr.mxu0 0.0
      %560 = vmatpush1.msra.mxu0 0.0
      %561 = vmatprep.subr.mxu0 0.0
      %562 = vmatpush1.msra.mxu0 0.0
      %563 = vmatprep.subr.mxu0 0.0
      %564 = vmatpush1.msra.mxu0 0.0
      %565 = vmatprep.subr.mxu0 0.0
      %566 = vmatpush1.msra.mxu0 0.0
      %567 = vmatprep.subr.mxu0 0.0
      %568 = vmatpush1.msra.mxu0 0.0
      %569 = vmatprep.subr.mxu0 0.0
      %570 = vmatpush1.msra.mxu0 0.0
      %571 = vmatprep.subr.mxu0 0.0
      %572 = vmatpush1.msra.mxu0 0.0
      %573 = vmatprep.subr.mxu0 0.0
      %574 = vmatpush1.msra.mxu0 0.0
      %575 = vmatprep.subr.mxu0 0.0
      %576 = vmatpush1.msra.mxu0 0.0
      %577 = vmatprep.subr.mxu0 0.0
      %578 = vmatpush1.msra.mxu0 0.0
      %579 = vmatprep.subr.mxu0 0.0
      %580 = vmatpush1.msra.mxu0 0.0
      %581 = vmatprep.subr.mxu0 0.0
      %582 = vmatpush1.msra.mxu0 0.0
      %583 = vmatprep.subr.mxu0 0.0
      %584 = vmatpush1.msra.mxu0 0.0
      %585 = vmatprep.subr.mxu0 0.0
      %586 = vmatpush1.msra.mxu0 0.0
      %587 = vmatprep.subr.mxu0 0.0
      %588 = vmatpush1.msra.mxu0 0.0
      %589 = vmatprep.subr.mxu0 0.0
      %590 = vmatpush1.msra.mxu0 0.0
      %591 = vmatprep.subr.mxu0 0.0
      %592 = vmatpush1.msra.mxu0 0.0
      %593 = vmatprep.subr.mxu0 0.0
      %594 = vmatpush1.msra.mxu0 0.0
      %595 = vmatprep.subr.mxu0 0.0
      %596 = vmatpush1.msra.mxu0 0.0
      %597 = vmatprep.subr.mxu0 0.0
      %598 = vmatpush1.msra.mxu0 0.0
      %599 = vmatprep.subr.mxu0 0.0
      %600 = vmatpush1.msra.mxu0 0.0
      %601 = vmatprep.subr.mxu0 0.0
      %602 = vmatpush1.msra.mxu0 0.0
      %603 = vmatprep.subr.mxu0 0.0
      %604 = vmatpush1.msra.mxu0 0.0
      %605 = vmatprep.subr.mxu0 0.0
      %606 = vmatpush1.msra.mxu0 0.0
      %607 = vmatprep.subr.mxu0 0.0
      %608 = vmatpush1.msra.mxu0 0.0
      %609 = vmatprep.mubr.f32.mxu0 0.0
      %610 = vmatmul.mubr.f32.gmra.mrb[0].mxu0 %v519
      %v611 = vpop.f32.mrb[0].mxu0
      %v612 = vadd.f32 %v480, %v611
      %v613 = vpop.f32.mrb[0].mxu0
      %614 = vmatprep.mubr.f32.mxu0 0.0
      %615 = vmatmul.mubr.f32.gmra.mrb[0].mxu0 %v522
      %v616 = vpop.f32.mrb[0].mxu0
      %v617 = vadd.f32 %v485, %v616
      %v618 = vpop.f32.mrb[0].mxu0
      %619 = vmatprep.mubr.f32.mxu0 0.0
      %620 = vmatmul.mubr.f32.gmra.mrb[0].mxu0 %v525
      %v621 = vpop.f32.mrb[0].mxu0
      %v622 = vadd.f32 %v490, %v621
      %v623 = vpop.f32.mrb[0].mxu0
      %624 = vmatprep.mubr.f32.mxu0 0.0
      %625 = vmatmul.mubr.f32.gmra.mrb[0].mxu0 %v528
      %v626 = vpop.f32.mrb[0].mxu0
      %v627 = vadd.f32 %v495, %v626
      %v628 = vpop.f32.mrb[0].mxu0
      %629 = vmatprep.mubr.f32.mxu0 0.0
      %630 = vmatmul.mubr.f32.gmra.mrb[0].mxu0 %v531
      %v631 = vpop.f32.mrb[0].mxu0
      %v632 = vadd.f32 %v500, %v631
      %v633 = vpop.f32.mrb[0].mxu0
      %634 = vmatprep.mubr.f32.mxu0 0.0
      %635 = vmatmul.mubr.f32.gmra.mrb[0].mxu0 %v534
      %v636 = vpop.f32.mrb[0].mxu0
      %v637 = vadd.f32 %v505, %v636
      %v638 = vpop.f32.mrb[0].mxu0
      %639 = vmatprep.mubr.f32.mxu0 0.0
      %640 = vmatmul.mubr.f32.gmra.mrb[0].mxu0 %v537
      %v641 = vpop.f32.mrb[0].mxu0
      %v642 = vadd.f32 %v510, %v641
      %v643 = vpop.f32.mrb[0].mxu0
      %644 = vmatprep.mubr.f32.mxu0 0.0
      %645 = vmatmul.mubr.f32.gmra.mrb[0].mxu0 %v540
      %v646 = vpop.f32.mrb[0].mxu0
      %v647 = vadd.f32 %v515, %v646
      %v648 = vpop.f32.mrb[0].mxu0
      %649 = vdwg.mxu0
      %vm658 = vcmask 1046528
      %v659 = vrot.slane %v323, 1
      %v660 = vrot.slane %v324, 1
      %v661 = vsel %vm658, %v659, %v660
      %v662 = vrot.slane %v329, 1
      %v663 = vrot.slane %v330, 1
      %v664 = vsel %vm658, %v662, %v663
      %v665 = vrot.slane %v335, 1
      %v666 = vrot.slane %v336, 1
      %v667 = vsel %vm658, %v665, %v666
      %v668 = vrot.slane %v341, 1
      %v669 = vrot.slane %v342, 1
      %v670 = vsel %vm658, %v668, %v669
      %v671 = vrot.slane %v347, 1
      %v672 = vrot.slane %v348, 1
      %v673 = vsel %vm658, %v671, %v672
      %v674 = vrot.slane %v353, 1
      %v675 = vrot.slane %v354, 1
      %v676 = vsel %vm658, %v674, %v675
      %v677 = vrot.slane %v359, 1
      %v678 = vrot.slane %v360, 1
      %v679 = vsel %vm658, %v677, %v678
      %v680 = vrot.slane %v365, 1
      %v681 = vrot.slane %v366, 1
      %v682 = vsel %vm658, %v680, %v681
      %v683 = vsel %vm384, %v661, 0
      %v685 = vsel %vm384, %v664, 0
      %v687 = vsel %vm384, %v667, 0
      %v689 = vsel %vm384, %v670, 0
      %v691 = vsel %vm384, %v673, 0
      %v693 = vsel %vm384, %v676, 0
      %v695 = vsel %vm384, %v679, 0
      %v697 = vsel %vm384, %v682, 0
      %v700 = vsel %vm409, %v376, 0
      %702 = vmatprep.subr.mxu0 0.0
      %703 = vmatpush1.msra.mxu0 %v700
      %704 = vmatprep.subr.mxu0 0.0
      %705 = vmatpush1.msra.mxu0 0.0
      %706 = vmatprep.subr.mxu0 0.0
      %707 = vmatpush1.msra.mxu0 0.0
      %708 = vmatprep.subr.mxu0 0.0
      %709 = vmatpush1.msra.mxu0 0.0
      %710 = vmatprep.subr.mxu0 0.0
      %711 = vmatpush1.msra.mxu0 0.0
      %712 = vmatprep.subr.mxu0 0.0
      %713 = vmatpush1.msra.mxu0 0.0
      %714 = vmatprep.subr.mxu0 0.0
      %715 = vmatpush1.msra.mxu0 0.0
      %716 = vmatprep.subr.mxu0 0.0
      %717 = vmatpush1.msra.mxu0 0.0
      %718 = vmatprep.subr.mxu0 0.0
      %719 = vmatpush1.msra.mxu0 0.0
      %720 = vmatprep.subr.mxu0 0.0
      %721 = vmatpush1.msra.mxu0 0.0
      %722 = vmatprep.subr.mxu0 0.0
      %723 = vmatpush1.msra.mxu0 0.0
      %724 = vmatprep.subr.mxu0 0.0
      %725 = vmatpush1.msra.mxu0 0.0
      %726 = vmatprep.subr.mxu0 0.0
      %727 = vmatpush1.msra.mxu0 0.0
      %728 = vmatprep.subr.mxu0 0.0
      %729 = vmatpush1.msra.mxu0 0.0
      %730 = vmatprep.subr.mxu0 0.0
      %731 = vmatpush1.msra.mxu0 0.0
      %732 = vmatprep.subr.mxu0 0.0
      %733 = vmatpush1.msra.mxu0 0.0
      %734 = vmatprep.subr.mxu0 0.0
      %735 = vmatpush1.msra.mxu0 0.0
      %736 = vmatprep.subr.mxu0 0.0
      %737 = vmatpush1.msra.mxu0 0.0
      %738 = vmatprep.subr.mxu0 0.0
      %739 = vmatpush1.msra.mxu0 0.0
      %740 = vmatprep.subr.mxu0 0.0
      %741 = vmatpush1.msra.mxu0 0.0
      %742 = vmatprep.subr.mxu0 0.0
      %743 = vmatpush1.msra.mxu0 0.0
      %744 = vmatprep.subr.mxu0 0.0
      %745 = vmatpush1.msra.mxu0 0.0
      %746 = vmatprep.subr.mxu0 0.0
      %747 = vmatpush1.msra.mxu0 0.0
      %748 = vmatprep.subr.mxu0 0.0
      %749 = vmatpush1.msra.mxu0 0.0
      %750 = vmatprep.subr.mxu0 0.0
      %751 = vmatpush1.msra.mxu0 0.0
      %752 = vmatprep.subr.mxu0 0.0
      %753 = vmatpush1.msra.mxu0 0.0
      %754 = vmatprep.subr.mxu0 0.0
      %755 = vmatpush1.msra.mxu0 0.0
      %756 = vmatprep.subr.mxu0 0.0
      %757 = vmatpush1.msra.mxu0 0.0
      %758 = vmatprep.subr.mxu0 0.0
      %759 = vmatpush1.msra.mxu0 0.0
      %760 = vmatprep.subr.mxu0 0.0
      %761 = vmatpush1.msra.mxu0 0.0
      %762 = vmatprep.subr.mxu0 0.0
      %763 = vmatpush1.msra.mxu0 0.0
      %764 = vmatprep.subr.mxu0 0.0
      %765 = vmatpush1.msra.mxu0 0.0
      %766 = vmatprep.mubr.f32.mxu0 0.0
      %767 = vmatmul.mubr.f32.gmra.mrb[0].mxu0 %v683
      %v768 = vpop.f32.mrb[0].mxu0
      %v769 = vadd.f32 0.0, %v768
      %v770 = vpop.f32.mrb[0].mxu0
      %771 = vmatprep.mubr.f32.mxu0 0.0
      %772 = vmatmul.mubr.f32.gmra.mrb[0].mxu0 %v685
      %v773 = vpop.f32.mrb[0].mxu0
      %v774 = vadd.f32 0.0, %v773
      %v775 = vpop.f32.mrb[0].mxu0
      %776 = vmatprep.mubr.f32.mxu0 0.0
      %777 = vmatmul.mubr.f32.gmra.mrb[0].mxu0 %v687
      %v778 = vpop.f32.mrb[0].mxu0
      %v779 = vadd.f32 0.0, %v778
      %v780 = vpop.f32.mrb[0].mxu0
      %781 = vmatprep.mubr.f32.mxu0 0.0
      %782 = vmatmul.mubr.f32.gmra.mrb[0].mxu0 %v689
      %v783 = vpop.f32.mrb[0].mxu0
      %v784 = vadd.f32 0.0, %v783
      %v785 = vpop.f32.mrb[0].mxu0
      %786 = vmatprep.mubr.f32.mxu0 0.0
      %787 = vmatmul.mubr.f32.gmra.mrb[0].mxu0 %v691
      %v788 = vpop.f32.mrb[0].mxu0
      %v789 = vadd.f32 0.0, %v788
      %v790 = vpop.f32.mrb[0].mxu0
      %791 = vmatprep.mubr.f32.mxu0 0.0
      %792 = vmatmul.mubr.f32.gmra.mrb[0].mxu0 %v693
      %v793 = vpop.f32.mrb[0].mxu0
      %v794 = vadd.f32 0.0, %v793
      %v795 = vpop.f32.mrb[0].mxu0
      %796 = vmatprep.mubr.f32.mxu0 0.0
      %797 = vmatmul.mubr.f32.gmra.mrb[0].mxu0 %v695
      %v798 = vpop.f32.mrb[0].mxu0
      %v799 = vadd.f32 0.0, %v798
      %v800 = vpop.f32.mrb[0].mxu0
      %801 = vmatprep.mubr.f32.mxu0 0.0
      %802 = vmatmul.mubr.f32.gmra.mrb[0].mxu0 %v697
      %v803 = vpop.f32.mrb[0].mxu0
      %v804 = vadd.f32 0.0, %v803
      %v805 = vpop.f32.mrb[0].mxu0
      %806 = vdwg.mxu0
      %v807 = vadd.f32 %v612, %v769
      %v808 = vadd.f32 %v617, %v774
      %v809 = vadd.f32 %v622, %v779
      %v810 = vadd.f32 %v627, %v784
      %v811 = vadd.f32 %v632, %v789
      %v812 = vadd.f32 %v637, %v794
      %v813 = vadd.f32 %v642, %v799
      %v814 = vadd.f32 %v647, %v804
      %v816 = vsel %vm384, %v326, 0
      %v819 = vsel %vm384, %v332, 0
      %v822 = vsel %vm384, %v338, 0
      %v825 = vsel %vm384, %v344, 0
      %v828 = vsel %vm384, %v350, 0
      %v831 = vsel %vm384, %v356, 0
      %v834 = vsel %vm384, %v362, 0
      %v837 = vsel %vm384, %v368, 0
      %v840 = vsel %vm409, %v377, 0
      %842 = vmatprep.subr.mxu0 0.0
      %843 = vmatpush1.msra.mxu0 %v840
      %844 = vmatprep.subr.mxu0 0.0
      %845 = vmatpush1.msra.mxu0 0.0
      %846 = vmatprep.subr.mxu0 0.0
      %847 = vmatpush1.msra.mxu0 0.0
      %848 = vmatprep.subr.mxu0 0.0
      %849 = vmatpush1.msra.mxu0 0.0
      %850 = vmatprep.subr.mxu0 0.0
      %851 = vmatpush1.msra.mxu0 0.0
      %852 = vmatprep.subr.mxu0 0.0
      %853 = vmatpush1.msra.mxu0 0.0
      %854 = vmatprep.subr.mxu0 0.0
      %855 = vmatpush1.msra.mxu0 0.0
      %856 = vmatprep.subr.mxu0 0.0
      %857 = vmatpush1.msra.mxu0 0.0
      %858 = vmatprep.subr.mxu0 0.0
      %859 = vmatpush1.msra.mxu0 0.0
      %860 = vmatprep.subr.mxu0 0.0
      %861 = vmatpush1.msra.mxu0 0.0
      %862 = vmatprep.subr.mxu0 0.0
      %863 = vmatpush1.msra.mxu0 0.0
      %864 = vmatprep.subr.mxu0 0.0
      %865 = vmatpush1.msra.mxu0 0.0
      %866 = vmatprep.subr.mxu0 0.0
      %867 = vmatpush1.msra.mxu0 0.0
      %868 = vmatprep.subr.mxu0 0.0
      %869 = vmatpush1.msra.mxu0 0.0
      %870 = vmatprep.subr.mxu0 0.0
      %871 = vmatpush1.msra.mxu0 0.0
      %872 = vmatprep.subr.mxu0 0.0
      %873 = vmatpush1.msra.mxu0 0.0
      %874 = vmatprep.subr.mxu0 0.0
      %875 = vmatpush1.msra.mxu0 0.0
      %876 = vmatprep.subr.mxu0 0.0
      %877 = vmatpush1.msra.mxu0 0.0
      %878 = vmatprep.subr.mxu0 0.0
      %879 = vmatpush1.msra.mxu0 0.0
      %880 = vmatprep.subr.mxu0 0.0
      %881 = vmatpush1.msra.mxu0 0.0
      %882 = vmatprep.subr.mxu0 0.0
      %883 = vmatpush1.msra.mxu0 0.0
      %884 = vmatprep.subr.mxu0 0.0
      %885 = vmatpush1.msra.mxu0 0.0
      %886 = vmatprep.subr.mxu0 0.0
      %887 = vmatpush1.msra.mxu0 0.0
      %888 = vmatprep.subr.mxu0 0.0
      %889 = vmatpush1.msra.mxu0 0.0
      %890 = vmatprep.subr.mxu0 0.0
      %891 = vmatpush1.msra.mxu0 0.0
      %892 = vmatprep.subr.mxu0 0.0
      %893 = vmatpush1.msra.mxu0 0.0
      %894 = vmatprep.subr.mxu0 0.0
      %895 = vmatpush1.msra.mxu0 0.0
      %896 = vmatprep.subr.mxu0 0.0
      %897 = vmatpush1.msra.mxu0 0.0
      %898 = vmatprep.subr.mxu0 0.0
      %899 = vmatpush1.msra.mxu0 0.0
      %900 = vmatprep.subr.mxu0 0.0
      %901 = vmatpush1.msra.mxu0 0.0
      %902 = vmatprep.subr.mxu0 0.0
      %903 = vmatpush1.msra.mxu0 0.0
      %904 = vmatprep.subr.mxu0 0.0
      %905 = vmatpush1.msra.mxu0 0.0
      %906 = vmatprep.mubr.f32.mxu0 0.0
      %907 = vmatmul.mubr.f32.gmra.mrb[0].mxu0 %v816
      %v908 = vpop.f32.mrb[0].mxu0
      %v909 = vadd.f32 0.0, %v908
      %v910 = vpop.f32.mrb[0].mxu0
      %911 = vmatprep.mubr.f32.mxu0 0.0
      %912 = vmatmul.mubr.f32.gmra.mrb[0].mxu0 %v819
      %v913 = vpop.f32.mrb[0].mxu0
      %v914 = vadd.f32 0.0, %v913
      %v915 = vpop.f32.mrb[0].mxu0
      %916 = vmatprep.mubr.f32.mxu0 0.0
      %917 = vmatmul.mubr.f32.gmra.mrb[0].mxu0 %v822
      %v918 = vpop.f32.mrb[0].mxu0
      %v919 = vadd.f32 0.0, %v918
      %v920 = vpop.f32.mrb[0].mxu0
      %921 = vmatprep.mubr.f32.mxu0 0.0
      %922 = vmatmul.mubr.f32.gmra.mrb[0].mxu0 %v825
      %v923 = vpop.f32.mrb[0].mxu0
      %v924 = vadd.f32 0.0, %v923
      %v925 = vpop.f32.mrb[0].mxu0
      %926 = vmatprep.mubr.f32.mxu0 0.0
      %927 = vmatmul.mubr.f32.gmra.mrb[0].mxu0 %v828
      %v928 = vpop.f32.mrb[0].mxu0
      %v929 = vadd.f32 0.0, %v928
      %v930 = vpop.f32.mrb[0].mxu0
      %931 = vmatprep.mubr.f32.mxu0 0.0
      %932 = vmatmul.mubr.f32.gmra.mrb[0].mxu0 %v831
      %v933 = vpop.f32.mrb[0].mxu0
      %v934 = vadd.f32 0.0, %v933
      %v935 = vpop.f32.mrb[0].mxu0
      %936 = vmatprep.mubr.f32.mxu0 0.0
      %937 = vmatmul.mubr.f32.gmra.mrb[0].mxu0 %v834
      %v938 = vpop.f32.mrb[0].mxu0
      %v939 = vadd.f32 0.0, %v938
      %v940 = vpop.f32.mrb[0].mxu0
      %941 = vmatprep.mubr.f32.mxu0 0.0
      %942 = vmatmul.mubr.f32.gmra.mrb[0].mxu0 %v837
      %v943 = vpop.f32.mrb[0].mxu0
      %v944 = vadd.f32 0.0, %v943
      %v945 = vpop.f32.mrb[0].mxu0
      %946 = vdwg.mxu0
      %v947 = vadd.f32 %v807, %v909
      %v948 = vadd.f32 %v808, %v914
      %v949 = vadd.f32 %v809, %v919
      %v950 = vadd.f32 %v810, %v924
      %v951 = vadd.f32 %v811, %v929
      %v952 = vadd.f32 %v812, %v934
      %v953 = vadd.f32 %v813, %v939
      %v954 = vadd.f32 %v814, %v944
      %v956 = vsel %vm384, %v328, 0
      %v959 = vsel %vm384, %v334, 0
      %v962 = vsel %vm384, %v340, 0
      %v965 = vsel %vm384, %v346, 0
      %v968 = vsel %vm384, %v352, 0
      %v971 = vsel %vm384, %v358, 0
      %v974 = vsel %vm384, %v364, 0
      %v977 = vsel %vm384, %v370, 0
      %v980 = vsel %vm409, %v378, 0
      %982 = vmatprep.subr.mxu0 0.0
      %983 = vmatpush1.msra.mxu0 %v980
      %984 = vmatprep.subr.mxu0 0.0
      %985 = vmatpush1.msra.mxu0 0.0
      %986 = vmatprep.subr.mxu0 0.0
      %987 = vmatpush1.msra.mxu0 0.0
      %988 = vmatprep.subr.mxu0 0.0
      %989 = vmatpush1.msra.mxu0 0.0
      %990 = vmatprep.subr.mxu0 0.0
      %991 = vmatpush1.msra.mxu0 0.0
      %992 = vmatprep.subr.mxu0 0.0
      %993 = vmatpush1.msra.mxu0 0.0
      %994 = vmatprep.subr.mxu0 0.0
      %995 = vmatpush1.msra.mxu0 0.0
      %996 = vmatprep.subr.mxu0 0.0
      %997 = vmatpush1.msra.mxu0 0.0
      %998 = vmatprep.subr.mxu0 0.0
      %999 = vmatpush1.msra.mxu0 0.0
      %1000 = vmatprep.subr.mxu0 0.0
      %1001 = vmatpush1.msra.mxu0 0.0
      %1002 = vmatprep.subr.mxu0 0.0
      %1003 = vmatpush1.msra.mxu0 0.0
      %1004 = vmatprep.subr.mxu0 0.0
      %1005 = vmatpush1.msra.mxu0 0.0
      %1006 = vmatprep.subr.mxu0 0.0
      %1007 = vmatpush1.msra.mxu0 0.0
      %1008 = vmatprep.subr.mxu0 0.0
      %1009 = vmatpush1.msra.mxu0 0.0
      %1010 = vmatprep.subr.mxu0 0.0
      %1011 = vmatpush1.msra.mxu0 0.0
      %1012 = vmatprep.subr.mxu0 0.0
      %1013 = vmatpush1.msra.mxu0 0.0
      %1014 = vmatprep.subr.mxu0 0.0
      %1015 = vmatpush1.msra.mxu0 0.0
      %1016 = vmatprep.subr.mxu0 0.0
      %1017 = vmatpush1.msra.mxu0 0.0
      %1018 = vmatprep.subr.mxu0 0.0
      %1019 = vmatpush1.msra.mxu0 0.0
      %1020 = vmatprep.subr.mxu0 0.0
      %1021 = vmatpush1.msra.mxu0 0.0
      %1022 = vmatprep.subr.mxu0 0.0
      %1023 = vmatpush1.msra.mxu0 0.0
      %1024 = vmatprep.subr.mxu0 0.0
      %1025 = vmatpush1.msra.mxu0 0.0
      %1026 = vmatprep.subr.mxu0 0.0
      %1027 = vmatpush1.msra.mxu0 0.0
      %1028 = vmatprep.subr.mxu0 0.0
      %1029 = vmatpush1.msra.mxu0 0.0
      %1030 = vmatprep.subr.mxu0 0.0
      %1031 = vmatpush1.msra.mxu0 0.0
      %1032 = vmatprep.subr.mxu0 0.0
      %1033 = vmatpush1.msra.mxu0 0.0
      %1034 = vmatprep.subr.mxu0 0.0
      %1035 = vmatpush1.msra.mxu0 0.0
      %1036 = vmatprep.subr.mxu0 0.0
      %1037 = vmatpush1.msra.mxu0 0.0
      %1038 = vmatprep.subr.mxu0 0.0
      %1039 = vmatpush1.msra.mxu0 0.0
      %1040 = vmatprep.subr.mxu0 0.0
      %1041 = vmatpush1.msra.mxu0 0.0
      %1042 = vmatprep.subr.mxu0 0.0
      %1043 = vmatpush1.msra.mxu0 0.0
      %1044 = vmatprep.subr.mxu0 0.0
      %1045 = vmatpush1.msra.mxu0 0.0
      %1046 = vmatprep.mubr.f32.mxu0 0.0
      %1047 = vmatmul.mubr.f32.gmra.mrb[0].mxu0 %v956
      %v1048 = vpop.f32.mrb[0].mxu0
      %v1049 = vadd.f32 0.0, %v1048
      %v1050 = vpop.f32.mrb[0].mxu0
      %1051 = vmatprep.mubr.f32.mxu0 0.0
      %1052 = vmatmul.mubr.f32.gmra.mrb[0].mxu0 %v959
      %v1053 = vpop.f32.mrb[0].mxu0
      %v1054 = vadd.f32 0.0, %v1053
      %v1055 = vpop.f32.mrb[0].mxu0
      %1056 = vmatprep.mubr.f32.mxu0 0.0
      %1057 = vmatmul.mubr.f32.gmra.mrb[0].mxu0 %v962
      %v1058 = vpop.f32.mrb[0].mxu0
      %v1059 = vadd.f32 0.0, %v1058
      %v1060 = vpop.f32.mrb[0].mxu0
      %1061 = vmatprep.mubr.f32.mxu0 0.0
      %1062 = vmatmul.mubr.f32.gmra.mrb[0].mxu0 %v965
      %v1063 = vpop.f32.mrb[0].mxu0
      %v1064 = vadd.f32 0.0, %v1063
      %v1065 = vpop.f32.mrb[0].mxu0
      %1066 = vmatprep.mubr.f32.mxu0 0.0
      %1067 = vmatmul.mubr.f32.gmra.mrb[0].mxu0 %v968
      %v1068 = vpop.f32.mrb[0].mxu0
      %v1069 = vadd.f32 0.0, %v1068
      %v1070 = vpop.f32.mrb[0].mxu0
      %1071 = vmatprep.mubr.f32.mxu0 0.0
      %1072 = vmatmul.mubr.f32.gmra.mrb[0].mxu0 %v971
      %v1073 = vpop.f32.mrb[0].mxu0
      %v1074 = vadd.f32 0.0, %v1073
      %v1075 = vpop.f32.mrb[0].mxu0
      %1076 = vmatprep.mubr.f32.mxu0 0.0
      %1077 = vmatmul.mubr.f32.gmra.mrb[0].mxu0 %v974
      %v1078 = vpop.f32.mrb[0].mxu0
      %v1079 = vadd.f32 0.0, %v1078
      %v1080 = vpop.f32.mrb[0].mxu0
      %1081 = vmatprep.mubr.f32.mxu0 0.0
      %1082 = vmatmul.mubr.f32.gmra.mrb[0].mxu0 %v977
      %v1083 = vpop.f32.mrb[0].mxu0
      %v1084 = vadd.f32 0.0, %v1083
      %v1085 = vpop.f32.mrb[0].mxu0
      %1086 = vdwg.mxu0
      %v1087 = vadd.f32 %v947, %v1049
      %v1088 = vadd.f32 %v948, %v1054
      %v1089 = vadd.f32 %v949, %v1059
      %v1090 = vadd.f32 %v950, %v1064
      %v1091 = vadd.f32 %v951, %v1069
      %v1092 = vadd.f32 %v952, %v1074
      %v1093 = vadd.f32 %v953, %v1079
      %v1094 = vadd.f32 %v954, %v1084
      %v1103 = vrot.slane %v326, 1
      %v1104 = vrot.slane %v327, 1
      %v1105 = vsel %vm658, %v1103, %v1104
      %v1106 = vrot.slane %v332, 1
      %v1107 = vrot.slane %v333, 1
      %v1108 = vsel %vm658, %v1106, %v1107
      %v1109 = vrot.slane %v338, 1
      %v1110 = vrot.slane %v339, 1
      %v1111 = vsel %vm658, %v1109, %v1110
      %v1112 = vrot.slane %v344, 1
      %v1113 = vrot.slane %v345, 1
      %v1114 = vsel %vm658, %v1112, %v1113
      %v1115 = vrot.slane %v350, 1
      %v1116 = vrot.slane %v351, 1
      %v1117 = vsel %vm658, %v1115, %v1116
      %v1118 = vrot.slane %v356, 1
      %v1119 = vrot.slane %v357, 1
      %v1120 = vsel %vm658, %v1118, %v1119
      %v1121 = vrot.slane %v362, 1
      %v1122 = vrot.slane %v363, 1
      %v1123 = vsel %vm658, %v1121, %v1122
      %v1124 = vrot.slane %v368, 1
      %v1125 = vrot.slane %v369, 1
      %v1126 = vsel %vm658, %v1124, %v1125
      %v1127 = vsel %vm384, %v1105, 0
      %v1129 = vsel %vm384, %v1108, 0
      %v1131 = vsel %vm384, %v1111, 0
      %v1133 = vsel %vm384, %v1114, 0
      %v1135 = vsel %vm384, %v1117, 0
      %v1137 = vsel %vm384, %v1120, 0
      %v1139 = vsel %vm384, %v1123, 0
      %v1141 = vsel %vm384, %v1126, 0
      %v1144 = vsel %vm409, %v379, 0
      %1146 = vmatprep.subr.mxu0 0.0
      %1147 = vmatpush1.msra.mxu0 %v1144
      %1148 = vmatprep.subr.mxu0 0.0
      %1149 = vmatpush1.msra.mxu0 0.0
      %1150 = vmatprep.subr.mxu0 0.0
      %1151 = vmatpush1.msra.mxu0 0.0
      %1152 = vmatprep.subr.mxu0 0.0
      %1153 = vmatpush1.msra.mxu0 0.0
      %1154 = vmatprep.subr.mxu0 0.0
      %1155 = vmatpush1.msra.mxu0 0.0
      %1156 = vmatprep.subr.mxu0 0.0
      %1157 = vmatpush1.msra.mxu0 0.0
      %1158 = vmatprep.subr.mxu0 0.0
      %1159 = vmatpush1.msra.mxu0 0.0
      %1160 = vmatprep.subr.mxu0 0.0
      %1161 = vmatpush1.msra.mxu0 0.0
      %1162 = vmatprep.subr.mxu0 0.0
      %1163 = vmatpush1.msra.mxu0 0.0
      %1164 = vmatprep.subr.mxu0 0.0
      %1165 = vmatpush1.msra.mxu0 0.0
      %1166 = vmatprep.subr.mxu0 0.0
      %1167 = vmatpush1.msra.mxu0 0.0
      %1168 = vmatprep.subr.mxu0 0.0
      %1169 = vmatpush1.msra.mxu0 0.0
      %1170 = vmatprep.subr.mxu0 0.0
      %1171 = vmatpush1.msra.mxu0 0.0
      %1172 = vmatprep.subr.mxu0 0.0
      %1173 = vmatpush1.msra.mxu0 0.0
      %1174 = vmatprep.subr.mxu0 0.0
      %1175 = vmatpush1.msra.mxu0 0.0
      %1176 = vmatprep.subr.mxu0 0.0
      %1177 = vmatpush1.msra.mxu0 0.0
      %1178 = vmatprep.subr.mxu0 0.0
      %1179 = vmatpush1.msra.mxu0 0.0
      %1180 = vmatprep.subr.mxu0 0.0
      %1181 = vmatpush1.msra.mxu0 0.0
      %1182 = vmatprep.subr.mxu0 0.0
      %1183 = vmatpush1.msra.mxu0 0.0
      %1184 = vmatprep.subr.mxu0 0.0
      %1185 = vmatpush1.msra.mxu0 0.0
      %1186 = vmatprep.subr.mxu0 0.0
      %1187 = vmatpush1.msra.mxu0 0.0
      %1188 = vmatprep.subr.mxu0 0.0
      %1189 = vmatpush1.msra.mxu0 0.0
      %1190 = vmatprep.subr.mxu0 0.0
      %1191 = vmatpush1.msra.mxu0 0.0
      %1192 = vmatprep.subr.mxu0 0.0
      %1193 = vmatpush1.msra.mxu0 0.0
      %1194 = vmatprep.subr.mxu0 0.0
      %1195 = vmatpush1.msra.mxu0 0.0
      %1196 = vmatprep.subr.mxu0 0.0
      %1197 = vmatpush1.msra.mxu0 0.0
      %1198 = vmatprep.subr.mxu0 0.0
      %1199 = vmatpush1.msra.mxu0 0.0
      %1200 = vmatprep.subr.mxu0 0.0
      %1201 = vmatpush1.msra.mxu0 0.0
      %1202 = vmatprep.subr.mxu0 0.0
      %1203 = vmatpush1.msra.mxu0 0.0
      %1204 = vmatprep.subr.mxu0 0.0
      %1205 = vmatpush1.msra.mxu0 0.0
      %1206 = vmatprep.subr.mxu0 0.0
      %1207 = vmatpush1.msra.mxu0 0.0
      %1208 = vmatprep.subr.mxu0 0.0
      %1209 = vmatpush1.msra.mxu0 0.0
      %1210 = vmatprep.mubr.f32.mxu0 0.0
      %1211 = vmatmul.mubr.f32.gmra.mrb[0].mxu0 %v1127
      %v1212 = vpop.f32.mrb[0].mxu0
      %v1213 = vadd.f32 0.0, %v1212
      %v1214 = vpop.f32.mrb[0].mxu0
      %1215 = vmatprep.mubr.f32.mxu0 0.0
      %1216 = vmatmul.mubr.f32.gmra.mrb[0].mxu0 %v1129
      %v1217 = vpop.f32.mrb[0].mxu0
      %v1218 = vadd.f32 0.0, %v1217
      %v1219 = vpop.f32.mrb[0].mxu0
      %1220 = vmatprep.mubr.f32.mxu0 0.0
      %1221 = vmatmul.mubr.f32.gmra.mrb[0].mxu0 %v1131
      %v1222 = vpop.f32.mrb[0].mxu0
      %v1223 = vadd.f32 0.0, %v1222
      %v1224 = vpop.f32.mrb[0].mxu0
      %1225 = vmatprep.mubr.f32.mxu0 0.0
      %1226 = vmatmul.mubr.f32.gmra.mrb[0].mxu0 %v1133
      %v1227 = vpop.f32.mrb[0].mxu0
      %v1228 = vadd.f32 0.0, %v1227
      %v1229 = vpop.f32.mrb[0].mxu0
      %1230 = vmatprep.mubr.f32.mxu0 0.0
      %1231 = vmatmul.mubr.f32.gmra.mrb[0].mxu0 %v1135
      %v1232 = vpop.f32.mrb[0].mxu0
      %v1233 = vadd.f32 0.0, %v1232
      %v1234 = vpop.f32.mrb[0].mxu0
      %1235 = vmatprep.mubr.f32.mxu0 0.0
      %1236 = vmatmul.mubr.f32.gmra.mrb[0].mxu0 %v1137
      %v1237 = vpop.f32.mrb[0].mxu0
      %v1238 = vadd.f32 0.0, %v1237
      %v1239 = vpop.f32.mrb[0].mxu0
      %1240 = vmatprep.mubr.f32.mxu0 0.0
      %1241 = vmatmul.mubr.f32.gmra.mrb[0].mxu0 %v1139
      %v1242 = vpop.f32.mrb[0].mxu0
      %v1243 = vadd.f32 0.0, %v1242
      %v1244 = vpop.f32.mrb[0].mxu0
      %1245 = vmatprep.mubr.f32.mxu0 0.0
      %1246 = vmatmul.mubr.f32.gmra.mrb[0].mxu0 %v1141
      %v1247 = vpop.f32.mrb[0].mxu0
      %v1248 = vadd.f32 0.0, %v1247
      %v1249 = vpop.f32.mrb[0].mxu0
      %1250 = vdwg.mxu0
      %v1251 = vadd.f32 %v1087, %v1213
      %v1252 = vadd.f32 %v1088, %v1218
      %v1253 = vadd.f32 %v1089, %v1223
      %v1254 = vadd.f32 %v1090, %v1228
      %v1255 = vadd.f32 %v1091, %v1233
      %v1256 = vadd.f32 %v1092, %v1238
      %v1257 = vadd.f32 %v1093, %v1243
      %v1258 = vadd.f32 %v1094, %v1248
      %v1260 = vsel %vm384, %v371, 0
      %v1263 = vsel %vm409, %v380, 0
      %1265 = vmatprep.subr.mxu0 0.0
      %1266 = vmatpush1.msra.mxu0 %v1263
      %1267 = vmatprep.subr.mxu0 0.0
      %1268 = vmatpush1.msra.mxu0 0.0
      %1269 = vmatprep.subr.mxu0 0.0
      %1270 = vmatpush1.msra.mxu0 0.0
      %1271 = vmatprep.subr.mxu0 0.0
      %1272 = vmatpush1.msra.mxu0 0.0
      %1273 = vmatprep.subr.mxu0 0.0
      %1274 = vmatpush1.msra.mxu0 0.0
      %1275 = vmatprep.subr.mxu0 0.0
      %1276 = vmatpush1.msra.mxu0 0.0
      %1277 = vmatprep.subr.mxu0 0.0
      %1278 = vmatpush1.msra.mxu0 0.0
      %1279 = vmatprep.subr.mxu0 0.0
      %1280 = vmatpush1.msra.mxu0 0.0
      %1281 = vmatprep.subr.mxu0 0.0
      %1282 = vmatpush1.msra.mxu0 0.0
      %1283 = vmatprep.subr.mxu0 0.0
      %1284 = vmatpush1.msra.mxu0 0.0
      %1285 = vmatprep.subr.mxu0 0.0
      %1286 = vmatpush1.msra.mxu0 0.0
      %1287 = vmatprep.subr.mxu0 0.0
      %1288 = vmatpush1.msra.mxu0 0.0
      %1289 = vmatprep.subr.mxu0 0.0
      %1290 = vmatpush1.msra.mxu0 0.0
      %1291 = vmatprep.subr.mxu0 0.0
      %1292 = vmatpush1.msra.mxu0 0.0
      %1293 = vmatprep.subr.mxu0 0.0
      %1294 = vmatpush1.msra.mxu0 0.0
      %1295 = vmatprep.subr.mxu0 0.0
      %1296 = vmatpush1.msra.mxu0 0.0
      %1297 = vmatprep.subr.mxu0 0.0
      %1298 = vmatpush1.msra.mxu0 0.0
      %1299 = vmatprep.subr.mxu0 0.0
      %1300 = vmatpush1.msra.mxu0 0.0
      %1301 = vmatprep.subr.mxu0 0.0
      %1302 = vmatpush1.msra.mxu0 0.0
      %1303 = vmatprep.subr.mxu0 0.0
      %1304 = vmatpush1.msra.mxu0 0.0
      %1305 = vmatprep.subr.mxu0 0.0
      %1306 = vmatpush1.msra.mxu0 0.0
      %1307 = vmatprep.subr.mxu0 0.0
      %1308 = vmatpush1.msra.mxu0 0.0
      %1309 = vmatprep.subr.mxu0 0.0
      %1310 = vmatpush1.msra.mxu0 0.0
      %1311 = vmatprep.subr.mxu0 0.0
      %1312 = vmatpush1.msra.mxu0 0.0
      %1313 = vmatprep.subr.mxu0 0.0
      %1314 = vmatpush1.msra.mxu0 0.0
      %1315 = vmatprep.subr.mxu0 0.0
      %1316 = vmatpush1.msra.mxu0 0.0
      %1317 = vmatprep.subr.mxu0 0.0
      %1318 = vmatpush1.msra.mxu0 0.0
      %1319 = vmatprep.subr.mxu0 0.0
      %1320 = vmatpush1.msra.mxu0 0.0
      %1321 = vmatprep.subr.mxu0 0.0
      %1322 = vmatpush1.msra.mxu0 0.0
      %1323 = vmatprep.subr.mxu0 0.0
      %1324 = vmatpush1.msra.mxu0 0.0
      %1325 = vmatprep.subr.mxu0 0.0
      %1326 = vmatpush1.msra.mxu0 0.0
      %1327 = vmatprep.subr.mxu0 0.0
      %1328 = vmatpush1.msra.mxu0 0.0
      %1329 = vmatprep.mubr.f32.mxu0 0.0
      %1330 = vmatmul.mubr.f32.gmra.mrb[0].mxu0 %v522
      %v1331 = vpop.f32.mrb[0].mxu0
      %v1332 = vadd.f32 0.0, %v1331
      %v1333 = vpop.f32.mrb[0].mxu0
      %1334 = vmatprep.mubr.f32.mxu0 0.0
      %1335 = vmatmul.mubr.f32.gmra.mrb[0].mxu0 %v525
      %v1336 = vpop.f32.mrb[0].mxu0
      %v1337 = vadd.f32 0.0, %v1336
      %v1338 = vpop.f32.mrb[0].mxu0
      %1339 = vmatprep.mubr.f32.mxu0 0.0
      %1340 = vmatmul.mubr.f32.gmra.mrb[0].mxu0 %v528
      %v1341 = vpop.f32.mrb[0].mxu0
      %v1342 = vadd.f32 0.0, %v1341
      %v1343 = vpop.f32.mrb[0].mxu0
      %1344 = vmatprep.mubr.f32.mxu0 0.0
      %1345 = vmatmul.mubr.f32.gmra.mrb[0].mxu0 %v531
      %v1346 = vpop.f32.mrb[0].mxu0
      %v1347 = vadd.f32 0.0, %v1346
      %v1348 = vpop.f32.mrb[0].mxu0
      %1349 = vmatprep.mubr.f32.mxu0 0.0
      %1350 = vmatmul.mubr.f32.gmra.mrb[0].mxu0 %v534
      %v1351 = vpop.f32.mrb[0].mxu0
      %v1352 = vadd.f32 0.0, %v1351
      %v1353 = vpop.f32.mrb[0].mxu0
      %1354 = vmatprep.mubr.f32.mxu0 0.0
      %1355 = vmatmul.mubr.f32.gmra.mrb[0].mxu0 %v537
      %v1356 = vpop.f32.mrb[0].mxu0
      %v1357 = vadd.f32 0.0, %v1356
      %v1358 = vpop.f32.mrb[0].mxu0
      %1359 = vmatprep.mubr.f32.mxu0 0.0
      %1360 = vmatmul.mubr.f32.gmra.mrb[0].mxu0 %v540
      %v1361 = vpop.f32.mrb[0].mxu0
      %v1362 = vadd.f32 0.0, %v1361
      %v1363 = vpop.f32.mrb[0].mxu0
      %1364 = vmatprep.mubr.f32.mxu0 0.0
      %1365 = vmatmul.mubr.f32.gmra.mrb[0].mxu0 %v1260
      %v1366 = vpop.f32.mrb[0].mxu0
      %v1367 = vadd.f32 0.0, %v1366
      %v1368 = vpop.f32.mrb[0].mxu0
      %1369 = vdwg.mxu0
      %v1370 = vadd.f32 %v1251, %v1332
      %v1371 = vadd.f32 %v1252, %v1337
      %v1372 = vadd.f32 %v1253, %v1342
      %v1373 = vadd.f32 %v1254, %v1347
      %v1374 = vadd.f32 %v1255, %v1352
      %v1375 = vadd.f32 %v1256, %v1357
      %v1376 = vadd.f32 %v1257, %v1362
      %v1377 = vadd.f32 %v1258, %v1367
      %v1379 = vsel %vm384, %v373, 0
      %v1382 = vsel %vm409, %v381, 0
      %1384 = vmatprep.subr.mxu0 0.0
      %1385 = vmatpush1.msra.mxu0 %v1382
      %1386 = vmatprep.subr.mxu0 0.0
      %1387 = vmatpush1.msra.mxu0 0.0
      %1388 = vmatprep.subr.mxu0 0.0
      %1389 = vmatpush1.msra.mxu0 0.0
      %1390 = vmatprep.subr.mxu0 0.0
      %1391 = vmatpush1.msra.mxu0 0.0
      %1392 = vmatprep.subr.mxu0 0.0
      %1393 = vmatpush1.msra.mxu0 0.0
      %1394 = vmatprep.subr.mxu0 0.0
      %1395 = vmatpush1.msra.mxu0 0.0
      %1396 = vmatprep.subr.mxu0 0.0
      %1397 = vmatpush1.msra.mxu0 0.0
      %1398 = vmatprep.subr.mxu0 0.0
      %1399 = vmatpush1.msra.mxu0 0.0
      %1400 = vmatprep.subr.mxu0 0.0
      %1401 = vmatpush1.msra.mxu0 0.0
      %1402 = vmatprep.subr.mxu0 0.0
      %1403 = vmatpush1.msra.mxu0 0.0
      %1404 = vmatprep.subr.mxu0 0.0
      %1405 = vmatpush1.msra.mxu0 0.0
      %1406 = vmatprep.subr.mxu0 0.0
      %1407 = vmatpush1.msra.mxu0 0.0
      %1408 = vmatprep.subr.mxu0 0.0
      %1409 = vmatpush1.msra.mxu0 0.0
      %1410 = vmatprep.subr.mxu0 0.0
      %1411 = vmatpush1.msra.mxu0 0.0
      %1412 = vmatprep.subr.mxu0 0.0
      %1413 = vmatpush1.msra.mxu0 0.0
      %1414 = vmatprep.subr.mxu0 0.0
      %1415 = vmatpush1.msra.mxu0 0.0
      %1416 = vmatprep.subr.mxu0 0.0
      %1417 = vmatpush1.msra.mxu0 0.0
      %1418 = vmatprep.subr.mxu0 0.0
      %1419 = vmatpush1.msra.mxu0 0.0
      %1420 = vmatprep.subr.mxu0 0.0
      %1421 = vmatpush1.msra.mxu0 0.0
      %1422 = vmatprep.subr.mxu0 0.0
      %1423 = vmatpush1.msra.mxu0 0.0
      %1424 = vmatprep.subr.mxu0 0.0
      %1425 = vmatpush1.msra.mxu0 0.0
      %1426 = vmatprep.subr.mxu0 0.0
      %1427 = vmatpush1.msra.mxu0 0.0
      %1428 = vmatprep.subr.mxu0 0.0
      %1429 = vmatpush1.msra.mxu0 0.0
      %1430 = vmatprep.subr.mxu0 0.0
      %1431 = vmatpush1.msra.mxu0 0.0
      %1432 = vmatprep.subr.mxu0 0.0
      %1433 = vmatpush1.msra.mxu0 0.0
      %1434 = vmatprep.subr.mxu0 0.0
      %1435 = vmatpush1.msra.mxu0 0.0
      %1436 = vmatprep.subr.mxu0 0.0
      %1437 = vmatpush1.msra.mxu0 0.0
      %1438 = vmatprep.subr.mxu0 0.0
      %1439 = vmatpush1.msra.mxu0 0.0
      %1440 = vmatprep.subr.mxu0 0.0
      %1441 = vmatpush1.msra.mxu0 0.0
      %1442 = vmatprep.subr.mxu0 0.0
      %1443 = vmatpush1.msra.mxu0 0.0
      %1444 = vmatprep.subr.mxu0 0.0
      %1445 = vmatpush1.msra.mxu0 0.0
      %1446 = vmatprep.subr.mxu0 0.0
      %1447 = vmatpush1.msra.mxu0 0.0
      %1448 = vmatprep.mubr.f32.mxu0 0.0
      %1449 = vmatmul.mubr.f32.gmra.mrb[0].mxu0 %v389
      %v1450 = vpop.f32.mrb[0].mxu0
      %v1451 = vadd.f32 0.0, %v1450
      %v1452 = vpop.f32.mrb[0].mxu0
      %1453 = vmatprep.mubr.f32.mxu0 0.0
      %1454 = vmatmul.mubr.f32.gmra.mrb[0].mxu0 %v392
      %v1455 = vpop.f32.mrb[0].mxu0
      %v1456 = vadd.f32 0.0, %v1455
      %v1457 = vpop.f32.mrb[0].mxu0
      %1458 = vmatprep.mubr.f32.mxu0 0.0
      %1459 = vmatmul.mubr.f32.gmra.mrb[0].mxu0 %v395
      %v1460 = vpop.f32.mrb[0].mxu0
      %v1461 = vadd.f32 0.0, %v1460
      %v1462 = vpop.f32.mrb[0].mxu0
      %1463 = vmatprep.mubr.f32.mxu0 0.0
      %1464 = vmatmul.mubr.f32.gmra.mrb[0].mxu0 %v398
      %v1465 = vpop.f32.mrb[0].mxu0
      %v1466 = vadd.f32 0.0, %v1465
      %v1467 = vpop.f32.mrb[0].mxu0
      %1468 = vmatprep.mubr.f32.mxu0 0.0
      %1469 = vmatmul.mubr.f32.gmra.mrb[0].mxu0 %v401
      %v1470 = vpop.f32.mrb[0].mxu0
      %v1471 = vadd.f32 0.0, %v1470
      %v1472 = vpop.f32.mrb[0].mxu0
      %1473 = vmatprep.mubr.f32.mxu0 0.0
      %1474 = vmatmul.mubr.f32.gmra.mrb[0].mxu0 %v404
      %v1475 = vpop.f32.mrb[0].mxu0
      %v1476 = vadd.f32 0.0, %v1475
      %v1477 = vpop.f32.mrb[0].mxu0
      %1478 = vmatprep.mubr.f32.mxu0 0.0
      %1479 = vmatmul.mubr.f32.gmra.mrb[0].mxu0 %v407
      %v1480 = vpop.f32.mrb[0].mxu0
      %v1481 = vadd.f32 0.0, %v1480
      %v1482 = vpop.f32.mrb[0].mxu0
      %1483 = vmatprep.mubr.f32.mxu0 0.0
      %1484 = vmatmul.mubr.f32.gmra.mrb[0].mxu0 %v1379
      %v1485 = vpop.f32.mrb[0].mxu0
      %v1486 = vadd.f32 0.0, %v1485
      %v1487 = vpop.f32.mrb[0].mxu0
      %1488 = vdwg.mxu0
      %v1489 = vadd.f32 %v1370, %v1451
      %v1490 = vadd.f32 %v1371, %v1456
      %v1491 = vadd.f32 %v1372, %v1461
      %v1492 = vadd.f32 %v1373, %v1466
      %v1493 = vadd.f32 %v1374, %v1471
      %v1494 = vadd.f32 %v1375, %v1476
      %v1495 = vadd.f32 %v1376, %v1481
      %v1496 = vadd.f32 %v1377, %v1486
      %v1498 = vrot.slane %v371, 1
      %v1499 = vrot.slane %v372, 1
      %v1500 = vsel %vm658, %v1498, %v1499
      %v1501 = vsel %vm384, %v1500, 0
      %v1504 = vsel %vm409, %v382, 0
      %1506 = vmatprep.subr.mxu0 0.0
      %1507 = vmatpush1.msra.mxu0 %v1504
      %1508 = vmatprep.subr.mxu0 0.0
      %1509 = vmatpush1.msra.mxu0 0.0
      %1510 = vmatprep.subr.mxu0 0.0
      %1511 = vmatpush1.msra.mxu0 0.0
      %1512 = vmatprep.subr.mxu0 0.0
      %1513 = vmatpush1.msra.mxu0 0.0
      %1514 = vmatprep.subr.mxu0 0.0
      %1515 = vmatpush1.msra.mxu0 0.0
      %1516 = vmatprep.subr.mxu0 0.0
      %1517 = vmatpush1.msra.mxu0 0.0
      %1518 = vmatprep.subr.mxu0 0.0
      %1519 = vmatpush1.msra.mxu0 0.0
      %1520 = vmatprep.subr.mxu0 0.0
      %1521 = vmatpush1.msra.mxu0 0.0
      %1522 = vmatprep.subr.mxu0 0.0
      %1523 = vmatpush1.msra.mxu0 0.0
      %1524 = vmatprep.subr.mxu0 0.0
      %1525 = vmatpush1.msra.mxu0 0.0
      %1526 = vmatprep.subr.mxu0 0.0
      %1527 = vmatpush1.msra.mxu0 0.0
      %1528 = vmatprep.subr.mxu0 0.0
      %1529 = vmatpush1.msra.mxu0 0.0
      %1530 = vmatprep.subr.mxu0 0.0
      %1531 = vmatpush1.msra.mxu0 0.0
      %1532 = vmatprep.subr.mxu0 0.0
      %1533 = vmatpush1.msra.mxu0 0.0
      %1534 = vmatprep.subr.mxu0 0.0
      %1535 = vmatpush1.msra.mxu0 0.0
      %1536 = vmatprep.subr.mxu0 0.0
      %1537 = vmatpush1.msra.mxu0 0.0
      %1538 = vmatprep.subr.mxu0 0.0
      %1539 = vmatpush1.msra.mxu0 0.0
      %1540 = vmatprep.subr.mxu0 0.0
      %1541 = vmatpush1.msra.mxu0 0.0
      %1542 = vmatprep.subr.mxu0 0.0
      %1543 = vmatpush1.msra.mxu0 0.0
      %1544 = vmatprep.subr.mxu0 0.0
      %1545 = vmatpush1.msra.mxu0 0.0
      %1546 = vmatprep.subr.mxu0 0.0
      %1547 = vmatpush1.msra.mxu0 0.0
      %1548 = vmatprep.subr.mxu0 0.0
      %1549 = vmatpush1.msra.mxu0 0.0
      %1550 = vmatprep.subr.mxu0 0.0
      %1551 = vmatpush1.msra.mxu0 0.0
      %1552 = vmatprep.subr.mxu0 0.0
      %1553 = vmatpush1.msra.mxu0 0.0
      %1554 = vmatprep.subr.mxu0 0.0
      %1555 = vmatpush1.msra.mxu0 0.0
      %1556 = vmatprep.subr.mxu0 0.0
      %1557 = vmatpush1.msra.mxu0 0.0
      %1558 = vmatprep.subr.mxu0 0.0
      %1559 = vmatpush1.msra.mxu0 0.0
      %1560 = vmatprep.subr.mxu0 0.0
      %1561 = vmatpush1.msra.mxu0 0.0
      %1562 = vmatprep.subr.mxu0 0.0
      %1563 = vmatpush1.msra.mxu0 0.0
      %1564 = vmatprep.subr.mxu0 0.0
      %1565 = vmatpush1.msra.mxu0 0.0
      %1566 = vmatprep.subr.mxu0 0.0
      %1567 = vmatpush1.msra.mxu0 0.0
      %1568 = vmatprep.subr.mxu0 0.0
      %1569 = vmatpush1.msra.mxu0 0.0
      %1570 = vmatprep.mubr.f32.mxu0 0.0
      %1571 = vmatmul.mubr.f32.gmra.mrb[0].mxu0 %v685
      %v1572 = vpop.f32.mrb[0].mxu0
      %v1573 = vadd.f32 0.0, %v1572
      %v1574 = vpop.f32.mrb[0].mxu0
      %1575 = vmatprep.mubr.f32.mxu0 0.0
      %1576 = vmatmul.mubr.f32.gmra.mrb[0].mxu0 %v687
      %v1577 = vpop.f32.mrb[0].mxu0
      %v1578 = vadd.f32 0.0, %v1577
      %v1579 = vpop.f32.mrb[0].mxu0
      %1580 = vmatprep.mubr.f32.mxu0 0.0
      %1581 = vmatmul.mubr.f32.gmra.mrb[0].mxu0 %v689
      %v1582 = vpop.f32.mrb[0].mxu0
      %v1583 = vadd.f32 0.0, %v1582
      %v1584 = vpop.f32.mrb[0].mxu0
      %1585 = vmatprep.mubr.f32.mxu0 0.0
      %1586 = vmatmul.mubr.f32.gmra.mrb[0].mxu0 %v691
      %v1587 = vpop.f32.mrb[0].mxu0
      %v1588 = vadd.f32 0.0, %v1587
      %v1589 = vpop.f32.mrb[0].mxu0
      %1590 = vmatprep.mubr.f32.mxu0 0.0
      %1591 = vmatmul.mubr.f32.gmra.mrb[0].mxu0 %v693
      %v1592 = vpop.f32.mrb[0].mxu0
      %v1593 = vadd.f32 0.0, %v1592
      %v1594 = vpop.f32.mrb[0].mxu0
      %1595 = vmatprep.mubr.f32.mxu0 0.0
      %1596 = vmatmul.mubr.f32.gmra.mrb[0].mxu0 %v695
      %v1597 = vpop.f32.mrb[0].mxu0
      %v1598 = vadd.f32 0.0, %v1597
      %v1599 = vpop.f32.mrb[0].mxu0
      %1600 = vmatprep.mubr.f32.mxu0 0.0
      %1601 = vmatmul.mubr.f32.gmra.mrb[0].mxu0 %v697
      %v1602 = vpop.f32.mrb[0].mxu0
      %v1603 = vadd.f32 0.0, %v1602
      %v1604 = vpop.f32.mrb[0].mxu0
      %1605 = vmatprep.mubr.f32.mxu0 0.0
      %1606 = vmatmul.mubr.f32.gmra.mrb[0].mxu0 %v1501
      %v1607 = vpop.f32.mrb[0].mxu0
      %v1608 = vadd.f32 0.0, %v1607
      %v1609 = vpop.f32.mrb[0].mxu0
      %1610 = vdwg.mxu0
      %v1611 = vadd.f32 %v1489, %v1573
      %v1612 = vadd.f32 %v1490, %v1578
      %v1613 = vadd.f32 %v1491, %v1583
      %v1614 = vadd.f32 %v1492, %v1588
      %v1615 = vadd.f32 %v1493, %v1593
      %v1616 = vadd.f32 %v1494, %v1598
      %v1617 = vadd.f32 %v1495, %v1603
      %v1618 = vadd.f32 %v1496, %v1608
      %v1620 = vlaneseq
      %v1621 = vshrl.u32 %v1620, 7
      %v1622 = vsub.s32 0, %v1621
      %v1623 = vrot.slane %v383, %v1622
      %v1625 = vadd.f32 %v1611, %v1623
      %v1626 = vadd.f32 %v1612, %v1623
      %v1627 = vadd.f32 %v1613, %v1623
      %v1628 = vadd.f32 %v1614, %v1623
      %v1629 = vadd.f32 %v1615, %v1623
      %v1630 = vadd.f32 %v1616, %v1623
      %v1631 = vadd.f32 %v1617, %v1623
      %v1632 = vadd.f32 %v1618, %v1623
      %1633 = vst.msk [vmem:[%s321] sm:$0xff] %vm384, %v1625
      %1634 = vst.msk [vmem:[%s321 + $0x8] sm:$0xff] %vm384, %v1626
      %1635 = vst.msk [vmem:[%s321 + $0x10] sm:$0xff] %vm384, %v1627
      %1636 = vst.msk [vmem:[%s321 + $0x18] sm:$0xff] %vm384, %v1628
      %1637 = vst.msk [vmem:[%s321 + $0x20] sm:$0xff] %vm384, %v1629
      %1638 = vst.msk [vmem:[%s321 + $0x28] sm:$0xff] %vm384, %v1630
      %1639 = vst.msk [vmem:[%s321 + $0x30] sm:$0xff] %vm384, %v1631
      %1640 = vst.msk [vmem:[%s321 + $0x38] sm:$0xff] %vm384, %v1632
      %s1641 = smul.u32 8, %s20
      %p1642 = scmp.lt.s32.totalorder %s19, 1
      %s1643 = scalar_select %p1642, %s19, 1
      %p1644 = scmp.lt.s32.totalorder %s1641, 7
      %s1645 = scalar_select %p1644, %s1641, 7
      %s1646 = smul.addr %s1643, 8
      %s1647 = sadd.s32 %s1645, %s1646
      %s1648 = smul.addr %s1647, 8
      %s1649 = scalar_lea.vmem %s4, %s1648
      // Predicated region
      $region37: #{downsample_forward.1} parent=35 // pred_check
        %p1650 = pneg %p149
      $region38: #{downsample_forward.1} parent=35 // pred_check_branch
        %1652 = sbr.rel (%p1650) target = $region40
      $region39: #{downsample_forward.1} parent=35 // pred_region
        %s1653 = smul.u32 8, %s20
      $region40: #{downsample_forward.1} parent=35 // pred_fallthru
        _
    $region36: #{downsample_forward.1} parent=5 // pred_fallthru
      _
    %p1654 = scmp.le.s32.totalorder 2, %s10
    // Predicated region
    $region41: #{downsample_forward.1} parent=5 // pred_check
      %p1655 = pneg %p1654
    $region42: #{downsample_forward.1} parent=5 // pred_check_branch
      %1657 = sbr.rel (%p1655) target = $region44
    $region43: #{downsample_forward.1} parent=5 // pred_region
      %s1658 = ssub.s32 %s10, 2
      // Predicated region
      $region45: #{downsample_forward.1} parent=43 // pred_check
        %p1659 = pneg %p155
      $region46: #{downsample_forward.1} parent=43 // pred_check_branch
        %1661 = sbr.rel (%p1659) target = $region48
      $region47: #{downsample_forward.1} parent=43 // pred_region
        %s1662 = smul.u32 8, %s22
        %p1663 = scmp.lt.s32.totalorder %s21, 1
        %s1664 = scalar_select %p1663, %s21, 1
        %p1665 = scmp.lt.s32.totalorder %s1662, 7
        %s1666 = scalar_select %p1665, %s1662, 7
        %s1667 = smul.addr %s1664, 8
        %s1668 = sadd.s32 %s1666, %s1667
        %s1669 = smul.addr %s1668, 8
        %s1670 = scalar_lea.vmem %s4, %s1669
      $region48: #{downsample_forward.1} parent=43 // pred_fallthru
        _
    $region44: #{downsample_forward.1} parent=5 // pred_fallthru
      _
  $region6: #{downsample_forward.1} parent=0 // loop_footer
    %s14 = sadd.s32 1, %s10
  $region7: #{downsample_forward.1} parent=0 // loop_footer_branch
    %9 = sbr.rel target = $region3
  $region8: #{downsample_forward.1} parent=0 // loop_exit
    _

</llo_original>
